<compile_context>
chip_gen: v7x
topology: tpu7x:2x2x1
jax: 0.10.0
libtpu: 0.0.40
codegen_flags: <defaults>
</compile_context>

<pallas_src>
import functools
import math

import jax
import jax.numpy as jnp
import numpy as np
from jax.experimental import pallas as pl
from jax.experimental.pallas import tpu as pltpu


def _round_up(v, m):
    return (v + m - 1) // m * m


def _knot_coef_rows(grid_T, spline_order, cin, W):
    """Precompute lane-dense knot rows + shared knot-difference reciprocals.

    Lane layout: position p = j*cin + i holds data for basis index j of input
    feature i.  Row order MUST match the read order in `_kan_kernel`:
      q = 0..K+1:                    knot(j+q)                     (u rows)
      k = 1..K, q = 0..K-k+1:        1 / (knot(j+q+k) - knot(j+q)) (Q rows)
    Reciprocal rows are zeroed wherever j+q > n_seg0-k (index out of range),
    which confines any out-of-range garbage to basis lanes whose weight rows
    are zero, so padding stays exact.
    """
    n_knots = grid_T.shape[0]
    n_seg0 = n_knots - 1
    K = spline_order
    p = jnp.arange(W)
    j_idx = p // cin
    i_idx = p % cin

    def knot(q):
        return grid_T[jnp.clip(q, 0, n_knots - 1), i_idx]

    rows = []
    for q in range(K + 2):                       # u rows (clipped; harmless OOB)
        rows.append(knot(j_idx + q))
    for k in range(1, K + 1):                    # shared reciprocal rows
        for q in range(K - k + 2):
            valid = (j_idx + q) <= (n_seg0 - k)
            d = knot(j_idx + q + k) - knot(j_idx + q)
            rows.append(jnp.where(valid, 1.0 / jnp.where(valid, d, 1.0), 0.0))
    return jnp.stack(rows).astype(jnp.float32)   # (NROWS, W)


def _kan_kernel(x_ref, rep_ref, coef_ref, w_ref, o_ref, *, spline_order):
    """x_ref:(TN,Cin)  rep_ref:(Cin,W)  coef_ref:(NROWS,W)
       w_ref:(W,Cout_pad)  o_ref:(TN,Cout_pad)."""
    K = spline_order
    x = x_ref[...]                                        # (TN, Cin) f32

    # Exact lane-dense replication: x_t[:, j*Cin + i] = x[:, i] (0/1 matmul;
    # Mosaic f32 matmul is exact — see header note / f32 check).
    x_t = jnp.dot(x, rep_ref[...], preferred_element_type=jnp.float32)  # (TN, W)

    coef = coef_ref[...]                                  # (NROWS, W), tiny
    r = 0

    # Shared differences u_q = x - knot(j+q), q = 0..K+1 — used by both the
    # order-0 indicators and every recursion step.
    u = []
    for _q in range(K + 2):
        u.append(x_t - coef[r:r + 1, :])
        r += 1

    # Order-0 indicator bases, shifted copies m = 0..K, from shared step
    # functions (knots monotone => indicator = cf_m - cf_{m+1}); no rolls, no
    # per-m compare pairs.
    cf = [(uq >= 0.0).astype(jnp.float32) for uq in u]
    A = [cf[m] - cf[m + 1] for m in range(K + 1)]

    # Cox-de Boor recursion, fully lane-dense; each step shares the common
    # reciprocal rows via Q[q] = r_{k,q} * A[q]:
    #   b^k_{j+m} = u_m * Q[m] - u_{m+k+1} * Q[m+1]
    for k in range(1, K + 1):
        Q = []
        for q in range(K - k + 2):
            Q.append(coef[r:r + 1, :] * A[q])
            r += 1
        A = [u[m] * Q[m] - u[m + k + 1] * Q[m + 1] for m in range(K - k + 1)]

    bases = A[0]                                          # (TN, W) lane-dense
    acc = jnp.dot(bases.astype(w_ref.dtype), w_ref[...],
                  preferred_element_type=jnp.float32)     # single K = W matmul
    o_ref[...] = acc.astype(o_ref.dtype)


def _vmem_bytes(tile_n, cin, W, cout_pad, n_coef_rows, w_itemsize, live_tmp=16):
    f32 = 4
    return (2 * tile_n * cin * f32            # x tile, double buffered
            + 2 * tile_n * cout_pad * f32     # out tile, double buffered
            + 2 * W * cout_pad * w_itemsize   # weights (worst case 2 buffers)
            + 2 * n_coef_rows * W * f32       # coef rows
            + 2 * cin * W * f32               # replication matrix
            + live_tmp * tile_n * W * f32)    # live (TN, W) f32 temporaries


def kan_linear_forward(x, grid_T, spline_weight, spline_scaler, *,
                       grid_size, spline_order, tile_n=512,
                       matmul_dtype=jnp.bfloat16):
    """x: (..., Cin). grid_T: (G+2k+1, Cin). spline_weight: (Cout, Cin, S).
       spline_scaler: (Cout, Cin). Returns (..., Cout)."""
    orig_shape = x.shape
    cin = x.shape[-1]
    cout = spline_weight.shape[0]
    K = spline_order
    S = grid_size + spline_order
    n_knots = grid_size + 2 * spline_order + 1
    assert grid_T.shape == (n_knots, cin)

    x2 = x.reshape(-1, cin).astype(jnp.float32)
    N = x2.shape[0]

    n_seg0 = n_knots - 1
    W = _round_up(n_seg0 * cin, 128)                       # lane-dense workspace
    cout_pad = _round_up(cout, 256) if cout > 128 else _round_up(cout, 128)

    coef = _knot_coef_rows(grid_T.astype(jnp.float32), K, cin, W)
    rep = (jnp.arange(W)[None, :] % cin ==
           jnp.arange(cin)[:, None]).astype(jnp.float32)   # (Cin, W) 0/1

    # Fold the standalone scaler into the weight once (hoisted out of the
    # kernel), flatten to (S*Cin, Cout) and zero-pad to the full (W, Cout_pad)
    # so the final matmul runs with K = W (no lane slice of the bases).
    w_scaled = spline_weight * spline_scaler[:, :, None]            # (Cout,Cin,S)
    w_flat = jnp.transpose(w_scaled, (2, 1, 0)).reshape(S * cin, cout)
    w_full = jnp.zeros((W, cout_pad), matmul_dtype)
    w_full = w_full.at[:S * cin, :cout].set(w_flat.astype(matmul_dtype))

    # tile_n: clamp to the (8-aligned) row count, then shrink to fit a
    # generation-aware VMEM budget; set the scoped-VMEM limit explicitly.
    tile_n = max(8, min(_round_up(tile_n, 8), _round_up(max(N, 1), 8)))
    try:
        phys_vmem = int(pltpu.get_tpu_info().vmem_capacity_bytes)
    except Exception:
        phys_vmem = 64 * 1024 * 1024                       # conservative (v7x)
    budget = min(int(phys_vmem * 0.65), 96 * 1024 * 1024)
    w_itemsize = jnp.dtype(matmul_dtype).itemsize
    n_coef_rows = coef.shape[0]
    while (_vmem_bytes(tile_n, cin, W, cout_pad, n_coef_rows, w_itemsize) > budget
           and tile_n > 64):
        tile_n = max(64, _round_up(tile_n // 2, 8))
    est = _vmem_bytes(tile_n, cin, W, cout_pad, n_coef_rows, w_itemsize)
    vmem_limit = int(min(max(est * 5 // 4, 32 * 1024 * 1024), budget))

    n_pad = _round_up(max(N, 1), tile_n)
    if n_pad != N:
        x2 = jnp.pad(x2, ((0, n_pad - N), (0, 0)))

    kernel = functools.partial(_kan_kernel, spline_order=K)

    def build(single_buffer_invariants):
        # Grid-invariant inputs (constant index_map) want a single VMEM buffer.
        inv_kw = ({"pipeline_mode": pl.Buffered(1)}
                  if single_buffer_invariants else {})
        return pl.pallas_call(
            kernel,
            out_shape=jax.ShapeDtypeStruct((n_pad, cout_pad), jnp.float32),
            grid_spec=pltpu.PrefetchScalarGridSpec(
                num_scalar_prefetch=0,
                grid=(n_pad // tile_n,),
                in_specs=[
                    pl.BlockSpec((tile_n, cin), lambda i: (i, 0)),
                    pl.BlockSpec(rep.shape, lambda i: (0, 0), **inv_kw),
                    pl.BlockSpec(coef.shape, lambda i: (0, 0), **inv_kw),
                    pl.BlockSpec(w_full.shape, lambda i: (0, 0), **inv_kw),
                ],
                out_specs=pl.BlockSpec((tile_n, cout_pad), lambda i: (i, 0)),
            ),
            compiler_params=pltpu.CompilerParams(
                dimension_semantics=("parallel",),
                vmem_limit_bytes=vmem_limit),
        )

    try:
        out = build(True)(x2, rep, coef, w_full)
    except Exception:
        # Fallback if this JAX build rejects pl.Buffered(1) single-buffering.
        out = build(False)(x2, rep, coef, w_full)

    out = out[:N, :cout].astype(x.dtype)
    return out.reshape(*orig_shape[:-1], cout)


def kan_linear_ref(x, grid_T, spline_weight, spline_scaler, *,
                   grid_size, spline_order):
    """Pure-JAX reference mirroring the PyTorch forward exactly."""
    grid = grid_T.T                                        # (Cin, G+2k+1)
    in_features = x.shape[-1]
    out_features = spline_weight.shape[0]
    xr = x.reshape(-1, in_features)
    xe = xr[:, :, None]
    bases = jnp.logical_and(xe >= grid[None, :, :-1],
                            xe < grid[None, :, 1:]).astype(xr.dtype)
    for k in range(1, spline_order + 1):
        bases = ((xe - grid[None, :, :-(k + 1)])
                 / (grid[None, :, k:-1] - grid[None, :, :-(k + 1)]) * bases[:, :, :-1]
                 + (grid[None, :, k + 1:] - xe)
                 / (grid[None, :, k + 1:] - grid[None, :, 1:-k]) * bases[:, :, 1:])
    w_scaled = spline_weight * spline_scaler[:, :, None]   # (Cout, Cin, S)
    out = jnp.einsum('nis,ois->no', bases, w_scaled)
    return out.reshape(*x.shape[:-1], out_features)


if __name__ == "__main__":
    # KANLinear default hyperparameters, small demo shapes.
    in_features = 16
    out_features = 32
    grid_size = 5
    spline_order = 3
    grid_range = (-1.0, 1.0)
    S = grid_size + spline_order                           # 8

    # Deterministic parameter init (synthetic; replaces the torch lstsq init).
    # TODO(synk): curve2coeff (torch.linalg.lstsq) init / update_grid are not
    # reproduced; parameters are drawn deterministically with matching shapes.
    key = jax.random.PRNGKey(0)
    kx, kw, ks = jax.random.split(key, 3)

    h = (grid_range[1] - grid_range[0]) / grid_size
    knots = (jnp.arange(-spline_order, grid_size + spline_order + 1,
                        dtype=jnp.float32) * h + grid_range[0])        # (G+2k+1,)
    grid_T = jnp.broadcast_to(knots[:, None],
                              (grid_size + 2 * spline_order + 1,
                               in_features)).astype(jnp.float32)       # (12, Cin)

    spline_weight = (0.1 * jax.random.normal(
        kw, (out_features, in_features, S), dtype=jnp.float32))
    bound = 1.0 / math.sqrt(in_features)
    spline_scaler = jax.random.uniform(
        ks, (out_features, in_features), dtype=jnp.float32,
        minval=-bound, maxval=bound)

    # Input: feature-last, leading dims (2, 8) -> N = 16 rows.
    x = jax.random.uniform(kx, (2, 8, in_features), dtype=jnp.float32,
                           minval=-1.0, maxval=1.0)

    ref = kan_linear_ref(x, grid_T, spline_weight, spline_scaler,
                         grid_size=grid_size, spline_order=spline_order)
    ref = jax.block_until_ready(ref)

    # 1) f32 matmul knob: tight correctness check (exact-path kernel).
    out_f32 = kan_linear_forward(x, grid_T, spline_weight, spline_scaler,
                                 grid_size=grid_size, spline_order=spline_order,
                                 matmul_dtype=jnp.float32)
    out_f32 = jax.block_until_ready(out_f32)
    assert out_f32.shape == (2, 8, out_features), out_f32.shape
    np.testing.assert_allclose(np.asarray(out_f32), np.asarray(ref),
                               rtol=1e-4, atol=3e-5)

    # 2) Default bf16 weights/bases (MXU fast path): tolerance gated on dtype.
    out_bf16 = kan_linear_forward(x, grid_T, spline_weight, spline_scaler,
                                  grid_size=grid_size, spline_order=spline_order)
    out_bf16 = jax.block_until_ready(out_bf16)
    assert out_bf16.shape == (2, 8, out_features), out_bf16.shape
    np.testing.assert_allclose(np.asarray(out_bf16), np.asarray(ref),
                               rtol=2e-2, atol=1e-2)

    print("KERNEL_OK")
</pallas_src>

<mosaic_0001>
module attributes {stable_mosaic.version = 11 : i64} {
  func.func @_kan_kernel(%arg0: i32, %arg1: memref<16x16xf32, #tpu.memory_space<vmem>>, %arg2: memref<16x256xf32, #tpu.memory_space<vmem>>, %arg3: memref<14x256xf32, #tpu.memory_space<vmem>>, %arg4: memref<256x128xf32, #tpu.memory_space<vmem>>, %arg5: memref<16x128xf32, #tpu.memory_space<vmem>>) attributes {dimension_semantics = [#tpu.dimension_semantics<parallel>], iteration_bounds = array<i64: 1>, scalar_prefetch = 0 : i64, scratch_operands = 0 : i64, tpu.core_type = #tpu.core_type<tc>, window_params = [{transform_indices = @transform_0, window_bounds = array<i64: 16, 16>}, {pipeline_mode = #tpu.pipeline_mode<synchronous>, transform_indices = @transform_1, window_bounds = array<i64: 16, 256>}, {pipeline_mode = #tpu.pipeline_mode<synchronous>, transform_indices = @transform_2, window_bounds = array<i64: 14, 256>}, {pipeline_mode = #tpu.pipeline_mode<synchronous>, transform_indices = @transform_3, window_bounds = array<i64: 256, 128>}, {transform_indices = @transform_4, window_bounds = array<i64: 16, 128>}]} {
    %c0 = arith.constant 0 : index
    %c0_0 = arith.constant 0 : index
    %0 = vector.load %arg1[%c0, %c0_0] : memref<16x16xf32, #tpu.memory_space<vmem>>, vector<16x16xf32>
    %c0_1 = arith.constant 0 : index
    %c0_2 = arith.constant 0 : index
    %1 = vector.load %arg2[%c0_1, %c0_2] : memref<16x256xf32, #tpu.memory_space<vmem>>, vector<16x256xf32>
    %cst = arith.constant dense<0.000000e+00> : vector<16x256xf32>
    %2 = tpu.matmul %0, %1, %cst {dimension_numbers = #tpu.dot_dimension_numbers<[1], [0], [0], [1], [0, 0, 1, 1], [], []>} : vector<16x16xf32>, vector<16x256xf32>, vector<16x256xf32> -> vector<16x256xf32>
    %c0_3 = arith.constant 0 : index
    %c0_4 = arith.constant 0 : index
    %3 = vector.load %arg3[%c0_3, %c0_4] : memref<14x256xf32, #tpu.memory_space<vmem>>, vector<14x256xf32>
    %4 = vector.extract_strided_slice %3 {offsets = [0, 0], sizes = [1, 256], strides = [1, 1]} : vector<14x256xf32> to vector<1x256xf32>
    %5 = vector.broadcast %4 : vector<1x256xf32> to vector<16x256xf32>
    %6 = arith.subf %2, %5 : vector<16x256xf32>
    %7 = vector.extract_strided_slice %3 {offsets = [1, 0], sizes = [1, 256], strides = [1, 1]} : vector<14x256xf32> to vector<1x256xf32>
    %8 = vector.broadcast %7 : vector<1x256xf32> to vector<16x256xf32>
    %9 = arith.subf %2, %8 : vector<16x256xf32>
    %10 = vector.extract_strided_slice %3 {offsets = [2, 0], sizes = [1, 256], strides = [1, 1]} : vector<14x256xf32> to vector<1x256xf32>
    %11 = vector.broadcast %10 : vector<1x256xf32> to vector<16x256xf32>
    %12 = arith.subf %2, %11 : vector<16x256xf32>
    %13 = vector.extract_strided_slice %3 {offsets = [3, 0], sizes = [1, 256], strides = [1, 1]} : vector<14x256xf32> to vector<1x256xf32>
    %14 = vector.broadcast %13 : vector<1x256xf32> to vector<16x256xf32>
    %15 = arith.subf %2, %14 : vector<16x256xf32>
    %16 = vector.extract_strided_slice %3 {offsets = [4, 0], sizes = [1, 256], strides = [1, 1]} : vector<14x256xf32> to vector<1x256xf32>
    %17 = vector.broadcast %16 : vector<1x256xf32> to vector<16x256xf32>
    %18 = arith.subf %2, %17 : vector<16x256xf32>
    %cst_5 = arith.constant 0.000000e+00 : f32
    %19 = vector.broadcast %cst_5 : f32 to vector<16x256xf32>
    %20 = arith.cmpf oge, %6, %19 : vector<16x256xf32>
    %21 = arith.extui %20 : vector<16x256xi1> to vector<16x256xi32>
    %22 = arith.sitofp %21 : vector<16x256xi32> to vector<16x256xf32>
    %cst_6 = arith.constant 0.000000e+00 : f32
    %23 = vector.broadcast %cst_6 : f32 to vector<16x256xf32>
    %24 = arith.cmpf oge, %9, %23 : vector<16x256xf32>
    %25 = arith.extui %24 : vector<16x256xi1> to vector<16x256xi32>
    %26 = arith.sitofp %25 : vector<16x256xi32> to vector<16x256xf32>
    %cst_7 = arith.constant 0.000000e+00 : f32
    %27 = vector.broadcast %cst_7 : f32 to vector<16x256xf32>
    %28 = arith.cmpf oge, %12, %27 : vector<16x256xf32>
    %29 = arith.extui %28 : vector<16x256xi1> to vector<16x256xi32>
    %30 = arith.sitofp %29 : vector<16x256xi32> to vector<16x256xf32>
    %cst_8 = arith.constant 0.000000e+00 : f32
    %31 = vector.broadcast %cst_8 : f32 to vector<16x256xf32>
    %32 = arith.cmpf oge, %15, %31 : vector<16x256xf32>
    %33 = arith.extui %32 : vector<16x256xi1> to vector<16x256xi32>
    %34 = arith.sitofp %33 : vector<16x256xi32> to vector<16x256xf32>
    %cst_9 = arith.constant 0.000000e+00 : f32
    %35 = vector.broadcast %cst_9 : f32 to vector<16x256xf32>
    %36 = arith.cmpf oge, %18, %35 : vector<16x256xf32>
    %37 = arith.extui %36 : vector<16x256xi1> to vector<16x256xi32>
    %38 = arith.sitofp %37 : vector<16x256xi32> to vector<16x256xf32>
    %39 = arith.subf %22, %26 : vector<16x256xf32>
    %40 = arith.subf %26, %30 : vector<16x256xf32>
    %41 = arith.subf %30, %34 : vector<16x256xf32>
    %42 = arith.subf %34, %38 : vector<16x256xf32>
    %43 = vector.extract_strided_slice %3 {offsets = [5, 0], sizes = [1, 256], strides = [1, 1]} : vector<14x256xf32> to vector<1x256xf32>
    %44 = vector.broadcast %43 : vector<1x256xf32> to vector<16x256xf32>
    %45 = arith.mulf %44, %39 : vector<16x256xf32>
    %46 = vector.extract_strided_slice %3 {offsets = [6, 0], sizes = [1, 256], strides = [1, 1]} : vector<14x256xf32> to vector<1x256xf32>
    %47 = vector.broadcast %46 : vector<1x256xf32> to vector<16x256xf32>
    %48 = arith.mulf %47, %40 : vector<16x256xf32>
    %49 = vector.extract_strided_slice %3 {offsets = [7, 0], sizes = [1, 256], strides = [1, 1]} : vector<14x256xf32> to vector<1x256xf32>
    %50 = vector.broadcast %49 : vector<1x256xf32> to vector<16x256xf32>
    %51 = arith.mulf %50, %41 : vector<16x256xf32>
    %52 = vector.extract_strided_slice %3 {offsets = [8, 0], sizes = [1, 256], strides = [1, 1]} : vector<14x256xf32> to vector<1x256xf32>
    %53 = vector.broadcast %52 : vector<1x256xf32> to vector<16x256xf32>
    %54 = arith.mulf %53, %42 : vector<16x256xf32>
    %55 = arith.mulf %6, %45 : vector<16x256xf32>
    %56 = arith.mulf %12, %48 : vector<16x256xf32>
    %57 = arith.subf %55, %56 : vector<16x256xf32>
    %58 = arith.mulf %9, %48 : vector<16x256xf32>
    %59 = arith.mulf %15, %51 : vector<16x256xf32>
    %60 = arith.subf %58, %59 : vector<16x256xf32>
    %61 = arith.mulf %12, %51 : vector<16x256xf32>
    %62 = arith.mulf %18, %54 : vector<16x256xf32>
    %63 = arith.subf %61, %62 : vector<16x256xf32>
    %64 = vector.extract_strided_slice %3 {offsets = [9, 0], sizes = [1, 256], strides = [1, 1]} : vector<14x256xf32> to vector<1x256xf32>
    %65 = vector.broadcast %64 : vector<1x256xf32> to vector<16x256xf32>
    %66 = arith.mulf %65, %57 : vector<16x256xf32>
    %67 = vector.extract_strided_slice %3 {offsets = [10, 0], sizes = [1, 256], strides = [1, 1]} : vector<14x256xf32> to vector<1x256xf32>
    %68 = vector.broadcast %67 : vector<1x256xf32> to vector<16x256xf32>
    %69 = arith.mulf %68, %60 : vector<16x256xf32>
    %70 = vector.extract_strided_slice %3 {offsets = [11, 0], sizes = [1, 256], strides = [1, 1]} : vector<14x256xf32> to vector<1x256xf32>
    %71 = vector.broadcast %70 : vector<1x256xf32> to vector<16x256xf32>
    %72 = arith.mulf %71, %63 : vector<16x256xf32>
    %73 = arith.mulf %6, %66 : vector<16x256xf32>
    %74 = arith.mulf %15, %69 : vector<16x256xf32>
    %75 = arith.subf %73, %74 : vector<16x256xf32>
    %76 = arith.mulf %9, %69 : vector<16x256xf32>
    %77 = arith.mulf %18, %72 : vector<16x256xf32>
    %78 = arith.subf %76, %77 : vector<16x256xf32>
    %79 = vector.extract_strided_slice %3 {offsets = [12, 0], sizes = [1, 256], strides = [1, 1]} : vector<14x256xf32> to vector<1x256xf32>
    %80 = vector.broadcast %79 : vector<1x256xf32> to vector<16x256xf32>
    %81 = arith.mulf %80, %75 : vector<16x256xf32>
    %82 = vector.extract_strided_slice %3 {offsets = [13, 0], sizes = [1, 256], strides = [1, 1]} : vector<14x256xf32> to vector<1x256xf32>
    %83 = vector.broadcast %82 : vector<1x256xf32> to vector<16x256xf32>
    %84 = arith.mulf %83, %78 : vector<16x256xf32>
    %85 = arith.mulf %6, %81 : vector<16x256xf32>
    %86 = arith.mulf %18, %84 : vector<16x256xf32>
    %87 = arith.subf %85, %86 : vector<16x256xf32>
    %c0_10 = arith.constant 0 : index
    %c0_11 = arith.constant 0 : index
    %88 = vector.load %arg4[%c0_10, %c0_11] : memref<256x128xf32, #tpu.memory_space<vmem>>, vector<256x128xf32>
    %cst_12 = arith.constant dense<0.000000e+00> : vector<16x128xf32>
    %89 = tpu.matmul %87, %88, %cst_12 {dimension_numbers = #tpu.dot_dimension_numbers<[1], [0], [0], [1], [0, 0, 1, 1], [], []>} : vector<16x256xf32>, vector<256x128xf32>, vector<16x128xf32> -> vector<16x128xf32>
    %c0_13 = arith.constant 0 : index
    %c0_14 = arith.constant 0 : index
    %90 = vector.load %arg5[%c0_13, %c0_14] : memref<16x128xf32, #tpu.memory_space<vmem>>, vector<16x128xf32>
    tpu.vector_store %arg5[%c0_13, %c0_14], %89 {strides = array<i32>} : memref<16x128xf32, #tpu.memory_space<vmem>>, vector<16x128xf32>,
    return
  }
  func.func @transform_0(%arg0: i32) -> (i32, i32) {
    %c0_i32 = arith.constant 0 : i32
    %c0_i32_0 = arith.constant 0 : i32
    return %arg0, %c0_i32 : i32, i32
  }
  func.func @transform_1(%arg0: i32) -> (i32, i32) {
    %c0_i32 = arith.constant 0 : i32
    %c0_i32_0 = arith.constant 0 : i32
    %c0_i32_1 = arith.constant 0 : i32
    return %c0_i32, %c0_i32_0 : i32, i32
  }
  func.func @transform_2(%arg0: i32) -> (i32, i32) {
    %c0_i32 = arith.constant 0 : i32
    %c0_i32_0 = arith.constant 0 : i32
    %c0_i32_1 = arith.constant 0 : i32
    return %c0_i32, %c0_i32_0 : i32, i32
  }
  func.func @transform_3(%arg0: i32) -> (i32, i32) {
    %c0_i32 = arith.constant 0 : i32
    %c0_i32_0 = arith.constant 0 : i32
    %c0_i32_1 = arith.constant 0 : i32
    return %c0_i32, %c0_i32_0 : i32, i32
  }
  func.func @transform_4(%arg0: i32) -> (i32, i32) {
    %c0_i32 = arith.constant 0 : i32
    %c0_i32_0 = arith.constant 0 : i32
    return %arg0, %c0_i32 : i32, i32
  }
}

module attributes {stable_mosaic.version = 11 : i64} {
  func.func @_kan_kernel(%arg0: i32, %arg1: memref<16x16xf32, #tpu.memory_space<vmem>>, %arg2: memref<16x256xf32, #tpu.memory_space<vmem>>, %arg3: memref<14x256xf32, #tpu.memory_space<vmem>>, %arg4: memref<256x128xf32, #tpu.memory_space<vmem>>, %arg5: memref<16x128xf32, #tpu.memory_space<vmem>>) attributes {dimension_semantics = [#tpu.dimension_semantics<parallel>], iteration_bounds = array<i64: 1>, scalar_prefetch = 0 : i64, scratch_operands = 0 : i64, tpu.core_type = #tpu.core_type<tc>, window_params = [{transform_indices = @transform_0, window_bounds = array<i64: 16, 16>}, {pipeline_mode = #tpu.pipeline_mode<synchronous>, transform_indices = @transform_1, window_bounds = array<i64: 16, 256>}, {pipeline_mode = #tpu.pipeline_mode<synchronous>, transform_indices = @transform_2, window_bounds = array<i64: 14, 256>}, {pipeline_mode = #tpu.pipeline_mode<synchronous>, transform_indices = @transform_3, window_bounds = array<i64: 256, 128>}, {transform_indices = @transform_4, window_bounds = array<i64: 16, 128>}]} {
    %c0 = arith.constant 0 : index
    %c0_0 = arith.constant 0 : index
    %0 = vector.load %arg1[%c0, %c0_0] : memref<16x16xf32, #tpu.memory_space<vmem>>, vector<16x16xf32>
    %c0_1 = arith.constant 0 : index
    %c0_2 = arith.constant 0 : index
    %1 = vector.load %arg2[%c0_1, %c0_2] : memref<16x256xf32, #tpu.memory_space<vmem>>, vector<16x256xf32>
    %cst = arith.constant dense<0.000000e+00> : vector<16x256xf32>
    %2 = tpu.matmul %0, %1, %cst {dimension_numbers = #tpu.dot_dimension_numbers<[1], [0], [0], [1], [0, 0, 1, 1], [], []>} : vector<16x16xf32>, vector<16x256xf32>, vector<16x256xf32> -> vector<16x256xf32>
    %c0_3 = arith.constant 0 : index
    %c0_4 = arith.constant 0 : index
    %3 = vector.load %arg3[%c0_3, %c0_4] : memref<14x256xf32, #tpu.memory_space<vmem>>, vector<14x256xf32>
    %4 = vector.extract_strided_slice %3 {offsets = [0, 0], sizes = [1, 256], strides = [1, 1]} : vector<14x256xf32> to vector<1x256xf32>
    %5 = vector.broadcast %4 : vector<1x256xf32> to vector<16x256xf32>
    %6 = arith.subf %2, %5 : vector<16x256xf32>
    %7 = vector.extract_strided_slice %3 {offsets = [1, 0], sizes = [1, 256], strides = [1, 1]} : vector<14x256xf32> to vector<1x256xf32>
    %8 = vector.broadcast %7 : vector<1x256xf32> to vector<16x256xf32>
    %9 = arith.subf %2, %8 : vector<16x256xf32>
    %10 = vector.extract_strided_slice %3 {offsets = [2, 0], sizes = [1, 256], strides = [1, 1]} : vector<14x256xf32> to vector<1x256xf32>
    %11 = vector.broadcast %10 : vector<1x256xf32> to vector<16x256xf32>
    %12 = arith.subf %2, %11 : vector<16x256xf32>
    %13 = vector.extract_strided_slice %3 {offsets = [3, 0], sizes = [1, 256], strides = [1, 1]} : vector<14x256xf32> to vector<1x256xf32>
    %14 = vector.broadcast %13 : vector<1x256xf32> to vector<16x256xf32>
    %15 = arith.subf %2, %14 : vector<16x256xf32>
    %16 = vector.extract_strided_slice %3 {offsets = [4, 0], sizes = [1, 256], strides = [1, 1]} : vector<14x256xf32> to vector<1x256xf32>
    %17 = vector.broadcast %16 : vector<1x256xf32> to vector<16x256xf32>
    %18 = arith.subf %2, %17 : vector<16x256xf32>
    %cst_5 = arith.constant 0.000000e+00 : f32
    %19 = vector.broadcast %cst_5 : f32 to vector<16x256xf32>
    %20 = arith.cmpf oge, %6, %19 : vector<16x256xf32>
    %21 = arith.extui %20 : vector<16x256xi1> to vector<16x256xi32>
    %22 = arith.sitofp %21 : vector<16x256xi32> to vector<16x256xf32>
    %cst_6 = arith.constant 0.000000e+00 : f32
    %23 = vector.broadcast %cst_6 : f32 to vector<16x256xf32>
    %24 = arith.cmpf oge, %9, %23 : vector<16x256xf32>
    %25 = arith.extui %24 : vector<16x256xi1> to vector<16x256xi32>
    %26 = arith.sitofp %25 : vector<16x256xi32> to vector<16x256xf32>
    %cst_7 = arith.constant 0.000000e+00 : f32
    %27 = vector.broadcast %cst_7 : f32 to vector<16x256xf32>
    %28 = arith.cmpf oge, %12, %27 : vector<16x256xf32>
    %29 = arith.extui %28 : vector<16x256xi1> to vector<16x256xi32>
    %30 = arith.sitofp %29 : vector<16x256xi32> to vector<16x256xf32>
    %cst_8 = arith.constant 0.000000e+00 : f32
    %31 = vector.broadcast %cst_8 : f32 to vector<16x256xf32>
    %32 = arith.cmpf oge, %15, %31 : vector<16x256xf32>
    %33 = arith.extui %32 : vector<16x256xi1> to vector<16x256xi32>
    %34 = arith.sitofp %33 : vector<16x256xi32> to vector<16x256xf32>
    %cst_9 = arith.constant 0.000000e+00 : f32
    %35 = vector.broadcast %cst_9 : f32 to vector<16x256xf32>
    %36 = arith.cmpf oge, %18, %35 : vector<16x256xf32>
    %37 = arith.extui %36 : vector<16x256xi1> to vector<16x256xi32>
    %38 = arith.sitofp %37 : vector<16x256xi32> to vector<16x256xf32>
    %39 = arith.subf %22, %26 : vector<16x256xf32>
    %40 = arith.subf %26, %30 : vector<16x256xf32>
    %41 = arith.subf %30, %34 : vector<16x256xf32>
    %42 = arith.subf %34, %38 : vector<16x256xf32>
    %43 = vector.extract_strided_slice %3 {offsets = [5, 0], sizes = [1, 256], strides = [1, 1]} : vector<14x256xf32> to vector<1x256xf32>
    %44 = vector.broadcast %43 : vector<1x256xf32> to vector<16x256xf32>
    %45 = arith.mulf %44, %39 : vector<16x256xf32>
    %46 = vector.extract_strided_slice %3 {offsets = [6, 0], sizes = [1, 256], strides = [1, 1]} : vector<14x256xf32> to vector<1x256xf32>
    %47 = vector.broadcast %46 : vector<1x256xf32> to vector<16x256xf32>
    %48 = arith.mulf %47, %40 : vector<16x256xf32>
    %49 = vector.extract_strided_slice %3 {offsets = [7, 0], sizes = [1, 256], strides = [1, 1]} : vector<14x256xf32> to vector<1x256xf32>
    %50 = vector.broadcast %49 : vector<1x256xf32> to vector<16x256xf32>
    %51 = arith.mulf %50, %41 : vector<16x256xf32>
    %52 = vector.extract_strided_slice %3 {offsets = [8, 0], sizes = [1, 256], strides = [1, 1]} : vector<14x256xf32> to vector<1x256xf32>
    %53 = vector.broadcast %52 : vector<1x256xf32> to vector<16x256xf32>
    %54 = arith.mulf %53, %42 : vector<16x256xf32>
    %55 = arith.mulf %6, %45 : vector<16x256xf32>
    %56 = arith.mulf %12, %48 : vector<16x256xf32>
    %57 = arith.subf %55, %56 : vector<16x256xf32>
    %58 = arith.mulf %9, %48 : vector<16x256xf32>
    %59 = arith.mulf %15, %51 : vector<16x256xf32>
    %60 = arith.subf %58, %59 : vector<16x256xf32>
    %61 = arith.mulf %12, %51 : vector<16x256xf32>
    %62 = arith.mulf %18, %54 : vector<16x256xf32>
    %63 = arith.subf %61, %62 : vector<16x256xf32>
    %64 = vector.extract_strided_slice %3 {offsets = [9, 0], sizes = [1, 256], strides = [1, 1]} : vector<14x256xf32> to vector<1x256xf32>
    %65 = vector.broadcast %64 : vector<1x256xf32> to vector<16x256xf32>
    %66 = arith.mulf %65, %57 : vector<16x256xf32>
    %67 = vector.extract_strided_slice %3 {offsets = [10, 0], sizes = [1, 256], strides = [1, 1]} : vector<14x256xf32> to vector<1x256xf32>
    %68 = vector.broadcast %67 : vector<1x256xf32> to vector<16x256xf32>
    %69 = arith.mulf %68, %60 : vector<16x256xf32>
    %70 = vector.extract_strided_slice %3 {offsets = [11, 0], sizes = [1, 256], strides = [1, 1]} : vector<14x256xf32> to vector<1x256xf32>
    %71 = vector.broadcast %70 : vector<1x256xf32> to vector<16x256xf32>
    %72 = arith.mulf %71, %63 : vector<16x256xf32>
    %73 = arith.mulf %6, %66 : vector<16x256xf32>
    %74 = arith.mulf %15, %69 : vector<16x256xf32>
    %75 = arith.subf %73, %74 : vector<16x256xf32>
    %76 = arith.mulf %9, %69 : vector<16x256xf32>
    %77 = arith.mulf %18, %72 : vector<16x256xf32>
    %78 = arith.subf %76, %77 : vector<16x256xf32>
    %79 = vector.extract_strided_slice %3 {offsets = [12, 0], sizes = [1, 256], strides = [1, 1]} : vector<14x256xf32> to vector<1x256xf32>
    %80 = vector.broadcast %79 : vector<1x256xf32> to vector<16x256xf32>
    %81 = arith.mulf %80, %75 : vector<16x256xf32>
    %82 = vector.extract_strided_slice %3 {offsets = [13, 0], sizes = [1, 256], strides = [1, 1]} : vector<14x256xf32> to vector<1x256xf32>
    %83 = vector.broadcast %82 : vector<1x256xf32> to vector<16x256xf32>
    %84 = arith.mulf %83, %78 : vector<16x256xf32>
    %85 = arith.mulf %6, %81 : vector<16x256xf32>
    %86 = arith.mulf %18, %84 : vector<16x256xf32>
    %87 = arith.subf %85, %86 : vector<16x256xf32>
    %c0_10 = arith.constant 0 : index
    %c0_11 = arith.constant 0 : index
    %88 = vector.load %arg4[%c0_10, %c0_11] : memref<256x128xf32, #tpu.memory_space<vmem>>, vector<256x128xf32>
    %cst_12 = arith.constant dense<0.000000e+00> : vector<16x128xf32>
    %89 = tpu.matmul %87, %88, %cst_12 {dimension_numbers = #tpu.dot_dimension_numbers<[1], [0], [0], [1], [0, 0, 1, 1], [], []>} : vector<16x256xf32>, vector<256x128xf32>, vector<16x128xf32> -> vector<16x128xf32>
    %c0_13 = arith.constant 0 : index
    %c0_14 = arith.constant 0 : index
    %90 = vector.load %arg5[%c0_13, %c0_14] : memref<16x128xf32, #tpu.memory_space<vmem>>, vector<16x128xf32>
    tpu.vector_store %arg5[%c0_13, %c0_14], %89 {strides = array<i32>} : memref<16x128xf32, #tpu.memory_space<vmem>>, vector<16x128xf32>,
    return
  }
  func.func @transform_0(%arg0: i32) -> (i32, i32) {
    %c0_i32 = arith.constant 0 : i32
    %c0_i32_0 = arith.constant 0 : i32
    return %arg0, %c0_i32 : i32, i32
  }
  func.func @transform_1(%arg0: i32) -> (i32, i32) {
    %c0_i32 = arith.constant 0 : i32
    %c0_i32_0 = arith.constant 0 : i32
    %c0_i32_1 = arith.constant 0 : i32
    return %c0_i32, %c0_i32_0 : i32, i32
  }
  func.func @transform_2(%arg0: i32) -> (i32, i32) {
    %c0_i32 = arith.constant 0 : i32
    %c0_i32_0 = arith.constant 0 : i32
    %c0_i32_1 = arith.constant 0 : i32
    return %c0_i32, %c0_i32_0 : i32, i32
  }
  func.func @transform_3(%arg0: i32) -> (i32, i32) {
    %c0_i32 = arith.constant 0 : i32
    %c0_i32_0 = arith.constant 0 : i32
    %c0_i32_1 = arith.constant 0 : i32
    return %c0_i32, %c0_i32_0 : i32, i32
  }
  func.func @transform_4(%arg0: i32) -> (i32, i32) {
    %c0_i32 = arith.constant 0 : i32
    %c0_i32_0 = arith.constant 0 : i32
    return %arg0, %c0_i32 : i32, i32
  }
}

</mosaic_0001>

<llo_original>
// kernel: tpu_custom_call.1
$region0: #{tpu_custom_call.1}
  #allocation0 [shape = 'u32[]', space=smem, size = 0x4, offset = 0x4, fixed_abs, tag = 'smem constant byte address 0x4 - core index']
  #allocation1 [shape = 'u32[144,128]{1,0:T(1,128)}', space=vmem, size = 0x12000, scoped, tag = 'internal scratch']
  %s0 = inlined_call_operand.hbm [shape: f32[16,16], index: 0, kind: input, shape index: {}]
  %s1 = inlined_call_operand.hbm [shape: f32[16,256], index: 1, kind: input, shape index: {}]
  %s2 = inlined_call_operand.hbm [shape: f32[14,256], index: 2, kind: input, shape index: {}]
  %s3 = inlined_call_operand.hbm [shape: f32[256,128], index: 3, kind: input, shape index: {}]
  %s4 = inlined_call_operand.hbm [shape: f32[16,128], index: 4, kind: output, shape index: {}]
  %s5 = sld [smem:[#allocation0]]
  $region42: #{tpu_custom_call.1} parent=0
    _
  %s7 = ssub.s32 1, %s5
  %s8 = scalar_select 0, %s7, %s5
  $region1: #{tpu_custom_call.1} parent=0
    #allocation2 [shape = 'u8[8192]{0}', space=vmem, size = 0x2000, scoped, tag = 'input window, operand 0, single buffered']
    #allocation3 [shape = 's32[1]{0}', space=sflag, size = 0x4, scoped, tag = 'scoped memory for tpu_custom_call.1']
    #allocation4 [shape = 's32[1]{0}', space=sflag, size = 0x4, scoped, tag = 'scoped memory for tpu_custom_call.1']
    #allocation5 [shape = 'u8[16384]{0}', space=vmem, size = 0x4000, scoped, tag = 'input window, operand 1, single buffered']
    #allocation6 [shape = 's32[1]{0}', space=sflag, size = 0x4, scoped, tag = 'scoped memory for tpu_custom_call.1']
    #allocation7 [shape = 'u8[16384]{0}', space=vmem, size = 0x4000, scoped, tag = 'input window, operand 2, single buffered']
    #allocation8 [shape = 'u8[131072]{0}', space=vmem, size = 0x20000, scoped, tag = 'input window, operand 3, single buffered']
    #allocation9 [shape = 's32[1]{0}', space=sflag, size = 0x4, scoped, tag = 'scoped memory for tpu_custom_call.1']
    #allocation10 [shape = 'u8[8192]{0}', space=vmem, size = 0x2000, scoped, tag = 'output window, operand 0, single buffered']
    %9 = vsyncpa [#allocation3], 0
    %10 = vsyncpa [#allocation6], 0
    %11 = vsyncpa [#allocation9], 0
    %12 = vsyncpa [#allocation4], 0
    // Predicated region
    $region2: #{tpu_custom_call.1} parent=1 // pred_check
      _
    $region3: #{tpu_custom_call.1} parent=1 // pred_check_branch
      %14 = sbr.rel (0) target = $region5
    $region4: #{tpu_custom_call.1} parent=1 // pred_region
      %s16 = ssub.s32 256, 256
      %17 = vsyncadd [#allocation3], %s16
      %s18 = sshll.u32 [#allocation2], 4
      %s19 = int_to_ptr.vmem [resolvable:$true] %s18
      %24 = dma.hbm_to_vmem [thread:$0]  %s0, 256, %s19, [#allocation3], 128, 128, 8
    $region5: #{tpu_custom_call.1} parent=1 // pred_fallthru
      _
    // Predicated region
    $region6: #{tpu_custom_call.1} parent=1 // pred_check
      _
    $region7: #{tpu_custom_call.1} parent=1 // pred_check_branch
      %26 = sbr.rel (0) target = $region9
    $region8: #{tpu_custom_call.1} parent=1 // pred_region
      %s28 = ssub.s32 512, 512
      %29 = vsyncadd [#allocation6], %s28
      %s30 = sshll.u32 [#allocation5], 4
      %s31 = int_to_ptr.vmem [resolvable:$true] %s30
      %36 = dma.hbm_to_vmem [thread:$0]  %s1, 512, %s31, [#allocation6], 256, 256, 16
    $region9: #{tpu_custom_call.1} parent=1 // pred_fallthru
      _
    // Predicated region
    $region10: #{tpu_custom_call.1} parent=1 // pred_check
      _
    $region11: #{tpu_custom_call.1} parent=1 // pred_check_branch
      %38 = sbr.rel (0) target = $region13
    $region12: #{tpu_custom_call.1} parent=1 // pred_region
      %s40 = ssub.s32 512, 512
      %41 = vsyncadd [#allocation6], %s40
      %s42 = sshll.u32 [#allocation7], 4
      %s43 = int_to_ptr.vmem [resolvable:$true] %s42
      %48 = dma.hbm_to_vmem [thread:$0]  %s2, 512, %s43, [#allocation6], 256, 256, 16
    $region13: #{tpu_custom_call.1} parent=1 // pred_fallthru
      _
    // Predicated region
    $region14: #{tpu_custom_call.1} parent=1 // pred_check
      _
    $region15: #{tpu_custom_call.1} parent=1 // pred_check_branch
      %50 = sbr.rel (0) target = $region17
    $region16: #{tpu_custom_call.1} parent=1 // pred_region
      %s52 = ssub.s32 4096, 4096
      %53 = vsyncadd [#allocation9], %s52
      %s54 = sshll.u32 [#allocation8], 4
      %s55 = int_to_ptr.vmem [resolvable:$true] %s54
      %60 = dma.hbm_to_vmem [thread:$0]  %s3, 4096, %s55, [#allocation9], 128, 128, 8
    $region17: #{tpu_custom_call.1} parent=1 // pred_fallthru
      _
    // Predicated region
    $region18: #{tpu_custom_call.1} parent=1 // pred_check
      _
    $region19: #{tpu_custom_call.1} parent=1 // pred_check_branch
      %62 = sbr.rel (0) target = $region21
    $region20: #{tpu_custom_call.1} parent=1 // pred_region
      %63 = dma.done [#allocation3], 256
    $region21: #{tpu_custom_call.1} parent=1 // pred_fallthru
      _
    // Predicated region
    $region22: #{tpu_custom_call.1} parent=1 // pred_check
      _
    $region23: #{tpu_custom_call.1} parent=1 // pred_check_branch
      %65 = sbr.rel (0) target = $region25
    $region24: #{tpu_custom_call.1} parent=1 // pred_region
      %66 = dma.done [#allocation6], 512
    $region25: #{tpu_custom_call.1} parent=1 // pred_fallthru
      _
    // Predicated region
    $region26: #{tpu_custom_call.1} parent=1 // pred_check
      _
    $region27: #{tpu_custom_call.1} parent=1 // pred_check_branch
      %68 = sbr.rel (0) target = $region29
    $region28: #{tpu_custom_call.1} parent=1 // pred_region
      %69 = dma.done [#allocation6], 512
    $region29: #{tpu_custom_call.1} parent=1 // pred_fallthru
      _
    // Predicated region
    $region30: #{tpu_custom_call.1} parent=1 // pred_check
      _
    $region31: #{tpu_custom_call.1} parent=1 // pred_check_branch
      %71 = sbr.rel (0) target = $region33
    $region32: #{tpu_custom_call.1} parent=1 // pred_region
      %72 = dma.done [#allocation9], 4096
    $region33: #{tpu_custom_call.1} parent=1 // pred_fallthru
      _
    %v73 = vld [vmem:[#allocation2] sm:$0xff]
    %v74 = vld [vmem:[#allocation2 + $0x8] sm:$0xff]
    %v75 = vld [vmem:[#allocation5] sm:$0xff]
    %v76 = vld [vmem:[#allocation5 + $0x8] sm:$0xff]
    %v77 = vld [vmem:[#allocation5 + $0x10] sm:$0xff]
    %v78 = vld [vmem:[#allocation5 + $0x18] sm:$0xff]
    %vm79 = vcmask 130048
    %v81 = vsel %vm79, %v73, 0
    %v84 = vsel %vm79, %v74, 0
    %86 = vmatprep.subr.mxu0 %v76
    %87 = vmatpush1.msra.mxu0 %v75
    %88 = vmatprep.subr.mxu0 %v78
    %89 = vmatpush1.msra.mxu0 %v77
    %90 = vmatprep.subr.mxu0 0.0
    %91 = vmatpush1.msra.mxu0 0.0
    %92 = vmatprep.subr.mxu0 0.0
    %93 = vmatpush1.msra.mxu0 0.0
    %94 = vmatprep.subr.mxu0 0.0
    %95 = vmatpush1.msra.mxu0 0.0
    %96 = vmatprep.subr.mxu0 0.0
    %97 = vmatpush1.msra.mxu0 0.0
    %98 = vmatprep.subr.mxu0 0.0
    %99 = vmatpush1.msra.mxu0 0.0
    %100 = vmatprep.subr.mxu0 0.0
    %101 = vmatpush1.msra.mxu0 0.0
    %102 = vmatprep.subr.mxu0 0.0
    %103 = vmatpush1.msra.mxu0 0.0
    %104 = vmatprep.subr.mxu0 0.0
    %105 = vmatpush1.msra.mxu0 0.0
    %106 = vmatprep.subr.mxu0 0.0
    %107 = vmatpush1.msra.mxu0 0.0
    %108 = vmatprep.subr.mxu0 0.0
    %109 = vmatpush1.msra.mxu0 0.0
    %110 = vmatprep.subr.mxu0 0.0
    %111 = vmatpush1.msra.mxu0 0.0
    %112 = vmatprep.subr.mxu0 0.0
    %113 = vmatpush1.msra.mxu0 0.0
    %114 = vmatprep.subr.mxu0 0.0
    %115 = vmatpush1.msra.mxu0 0.0
    %116 = vmatprep.subr.mxu0 0.0
    %117 = vmatpush1.msra.mxu0 0.0
    %118 = vmatprep.subr.mxu0 0.0
    %119 = vmatpush1.msra.mxu0 0.0
    %120 = vmatprep.subr.mxu0 0.0
    %121 = vmatpush1.msra.mxu0 0.0
    %122 = vmatprep.subr.mxu0 0.0
    %123 = vmatpush1.msra.mxu0 0.0
    %124 = vmatprep.subr.mxu0 0.0
    %125 = vmatpush1.msra.mxu0 0.0
    %126 = vmatprep.subr.mxu0 0.0
    %127 = vmatpush1.msra.mxu0 0.0
    %128 = vmatprep.subr.mxu0 0.0
    %129 = vmatpush1.msra.mxu0 0.0
    %130 = vmatprep.subr.mxu0 0.0
    %131 = vmatpush1.msra.mxu0 0.0
    %132 = vmatprep.subr.mxu0 0.0
    %133 = vmatpush1.msra.mxu0 0.0
    %134 = vmatprep.subr.mxu0 0.0
    %135 = vmatpush1.msra.mxu0 0.0
    %136 = vmatprep.subr.mxu0 0.0
    %137 = vmatpush1.msra.mxu0 0.0
    %138 = vmatprep.subr.mxu0 0.0
    %139 = vmatpush1.msra.mxu0 0.0
    %140 = vmatprep.subr.mxu0 0.0
    %141 = vmatpush1.msra.mxu0 0.0
    %142 = vmatprep.subr.mxu0 0.0
    %143 = vmatpush1.msra.mxu0 0.0
    %144 = vmatprep.subr.mxu0 0.0
    %145 = vmatpush1.msra.mxu0 0.0
    %146 = vmatprep.subr.mxu0 0.0
    %147 = vmatpush1.msra.mxu0 0.0
    %148 = vmatprep.subr.mxu0 0.0
    %149 = vmatpush1.msra.mxu0 0.0
    %150 = vmatprep.mubr.f32.mxu0 0.0
    %151 = vmatmul.mubr.f32.gmra.mrb[0].mxu0 %v81
    %v152 = vpop.f32.mrb[0].mxu0
    %v153 = vadd.f32 0.0, %v152
    %v154 = vpop.f32.mrb[0].mxu0
    %v155 = vadd.f32 0.0, %v154
    %156 = vmatprep.mubr.f32.mxu0 0.0
    %157 = vmatmul.mubr.f32.gmra.mrb[0].mxu0 %v84
    %v158 = vpop.f32.mrb[0].mxu0
    %v159 = vadd.f32 0.0, %v158
    %v160 = vpop.f32.mrb[0].mxu0
    %v161 = vadd.f32 0.0, %v160
    %162 = vdwg.mxu0
    %v163 = vld [vmem:[#allocation7] sm:$0xff]
    %v164 = vld [vmem:[#allocation7 + $0x8] sm:$0xff]
    %v165 = vld [vmem:[#allocation7 + $0x10] sm:$0x3f]
    %v166 = vld [vmem:[#allocation7 + $0x18] sm:$0x3f]
    %v167 = vlaneseq
    %v168 = vshrl.u32 %v167, 7
    %v169 = vsub.s32 0, %v168
    %v170 = vrot.slane %v163, %v169
    %v171 = vlaneseq
    %v172 = vshrl.u32 %v171, 7
    %v173 = vsub.s32 0, %v172
    %v174 = vrot.slane %v164, %v173
    %v175 = vsub.f32 %v153, %v170
    %v176 = vsub.f32 %v155, %v174
    %v177 = vsub.f32 %v159, %v170
    %v178 = vsub.f32 %v161, %v174
    %v179 = vlaneseq
    %v180 = vshrl.u32 %v179, 7
    %v181 = vsub.s32 1, %v180
    %v182 = vrot.slane %v163, %v181
    %v183 = vlaneseq
    %v184 = vshrl.u32 %v183, 7
    %v185 = vsub.s32 1, %v184
    %v186 = vrot.slane %v164, %v185
    %v187 = vsub.f32 %v153, %v182
    %v188 = vsub.f32 %v155, %v186
    %v189 = vsub.f32 %v159, %v182
    %v190 = vsub.f32 %v161, %v186
    %v191 = vlaneseq
    %v192 = vshrl.u32 %v191, 7
    %v193 = vsub.s32 2, %v192
    %v194 = vrot.slane %v163, %v193
    %v195 = vlaneseq
    %v196 = vshrl.u32 %v195, 7
    %v197 = vsub.s32 2, %v196
    %v198 = vrot.slane %v164, %v197
    %v199 = vsub.f32 %v153, %v194
    %v200 = vsub.f32 %v155, %v198
    %v201 = vsub.f32 %v159, %v194
    %v202 = vsub.f32 %v161, %v198
    %v203 = vlaneseq
    %v204 = vshrl.u32 %v203, 7
    %v205 = vsub.s32 3, %v204
    %v206 = vrot.slane %v163, %v205
    %v207 = vlaneseq
    %v208 = vshrl.u32 %v207, 7
    %v209 = vsub.s32 3, %v208
    %v210 = vrot.slane %v164, %v209
    %v211 = vsub.f32 %v153, %v206
    %v212 = vsub.f32 %v155, %v210
    %v213 = vsub.f32 %v159, %v206
    %v214 = vsub.f32 %v161, %v210
    %v215 = vlaneseq
    %v216 = vshrl.u32 %v215, 7
    %v217 = vsub.s32 4, %v216
    %v218 = vrot.slane %v163, %v217
    %v219 = vlaneseq
    %v220 = vshrl.u32 %v219, 7
    %v221 = vsub.s32 4, %v220
    %v222 = vrot.slane %v164, %v221
    %v223 = vsub.f32 %v153, %v218
    %v224 = vsub.f32 %v155, %v222
    %v225 = vsub.f32 %v159, %v218
    %v226 = vsub.f32 %v161, %v222
    %vm227 = vcmp.ge.f32.partialorder %v175, 0.0
    %vm228 = vcmp.ge.f32.partialorder %v176, 0.0
    %vm229 = vcmp.ge.f32.partialorder %v177, 0.0
    %vm230 = vcmp.ge.f32.partialorder %v178, 0.0
    %v231 = vsel %vm227, 1, 0
    %v232 = vsel %vm228, 1, 0
    %v233 = vsel %vm229, 1, 0
    %v234 = vsel %vm230, 1, 0
    %v235 = vcvt.s32.f32 %v231
    %v236 = vcvt.s32.f32 %v232
    %v237 = vcvt.s32.f32 %v233
    %v238 = vcvt.s32.f32 %v234
    %vm239 = vcmp.ge.f32.partialorder %v187, 0.0
    %vm240 = vcmp.ge.f32.partialorder %v188, 0.0
    %vm241 = vcmp.ge.f32.partialorder %v189, 0.0
    %vm242 = vcmp.ge.f32.partialorder %v190, 0.0
    %v243 = vsel %vm239, 1, 0
    %v244 = vsel %vm240, 1, 0
    %v245 = vsel %vm241, 1, 0
    %v246 = vsel %vm242, 1, 0
    %v247 = vcvt.s32.f32 %v243
    %v248 = vcvt.s32.f32 %v244
    %v249 = vcvt.s32.f32 %v245
    %v250 = vcvt.s32.f32 %v246
    %vm251 = vcmp.ge.f32.partialorder %v199, 0.0
    %vm252 = vcmp.ge.f32.partialorder %v200, 0.0
    %vm253 = vcmp.ge.f32.partialorder %v201, 0.0
    %vm254 = vcmp.ge.f32.partialorder %v202, 0.0
    %v255 = vsel %vm251, 1, 0
    %v256 = vsel %vm252, 1, 0
    %v257 = vsel %vm253, 1, 0
    %v258 = vsel %vm254, 1, 0
    %v259 = vcvt.s32.f32 %v255
    %v260 = vcvt.s32.f32 %v256
    %v261 = vcvt.s32.f32 %v257
    %v262 = vcvt.s32.f32 %v258
    %vm263 = vcmp.ge.f32.partialorder %v211, 0.0
    %vm264 = vcmp.ge.f32.partialorder %v212, 0.0
    %vm265 = vcmp.ge.f32.partialorder %v213, 0.0
    %vm266 = vcmp.ge.f32.partialorder %v214, 0.0
    %v267 = vsel %vm263, 1, 0
    %v268 = vsel %vm264, 1, 0
    %v269 = vsel %vm265, 1, 0
    %v270 = vsel %vm266, 1, 0
    %v271 = vcvt.s32.f32 %v267
    %v272 = vcvt.s32.f32 %v268
    %v273 = vcvt.s32.f32 %v269
    %v274 = vcvt.s32.f32 %v270
    %vm275 = vcmp.ge.f32.partialorder %v223, 0.0
    %vm276 = vcmp.ge.f32.partialorder %v224, 0.0
    %vm277 = vcmp.ge.f32.partialorder %v225, 0.0
    %vm278 = vcmp.ge.f32.partialorder %v226, 0.0
    %v279 = vsel %vm275, 1, 0
    %v280 = vsel %vm276, 1, 0
    %v281 = vsel %vm277, 1, 0
    %v282 = vsel %vm278, 1, 0
    %v283 = vcvt.s32.f32 %v279
    %v284 = vcvt.s32.f32 %v280
    %v285 = vcvt.s32.f32 %v281
    %v286 = vcvt.s32.f32 %v282
    %v287 = vsub.f32 %v235, %v247
    %v288 = vsub.f32 %v236, %v248
    %v289 = vsub.f32 %v237, %v249
    %v290 = vsub.f32 %v238, %v250
    %v291 = vsub.f32 %v247, %v259
    %v292 = vsub.f32 %v248, %v260
    %v293 = vsub.f32 %v249, %v261
    %v294 = vsub.f32 %v250, %v262
    %v295 = vsub.f32 %v259, %v271
    %v296 = vsub.f32 %v260, %v272
    %v297 = vsub.f32 %v261, %v273
    %v298 = vsub.f32 %v262, %v274
    %v299 = vsub.f32 %v271, %v283
    %v300 = vsub.f32 %v272, %v284
    %v301 = vsub.f32 %v273, %v285
    %v302 = vsub.f32 %v274, %v286
    %v303 = vlaneseq
    %v304 = vshrl.u32 %v303, 7
    %v305 = vsub.s32 5, %v304
    %v306 = vrot.slane %v163, %v305
    %v307 = vlaneseq
    %v308 = vshrl.u32 %v307, 7
    %v309 = vsub.s32 5, %v308
    %v310 = vrot.slane %v164, %v309
    %v311 = vmul.f32 %v306, %v287
    %v312 = vmul.f32 %v310, %v288
    %v313 = vmul.f32 %v306, %v289
    %v314 = vmul.f32 %v310, %v290
    %v315 = vlaneseq
    %v316 = vshrl.u32 %v315, 7
    %v317 = vsub.s32 6, %v316
    %v318 = vrot.slane %v163, %v317
    %v319 = vlaneseq
    %v320 = vshrl.u32 %v319, 7
    %v321 = vsub.s32 6, %v320
    %v322 = vrot.slane %v164, %v321
    %v323 = vmul.f32 %v318, %v291
    %v324 = vmul.f32 %v322, %v292
    %v325 = vmul.f32 %v318, %v293
    %v326 = vmul.f32 %v322, %v294
    %v327 = vlaneseq
    %v328 = vshrl.u32 %v327, 7
    %v329 = vsub.s32 7, %v328
    %v330 = vrot.slane %v163, %v329
    %v331 = vlaneseq
    %v332 = vshrl.u32 %v331, 7
    %v333 = vsub.s32 7, %v332
    %v334 = vrot.slane %v164, %v333
    %v335 = vmul.f32 %v330, %v295
    %v336 = vmul.f32 %v334, %v296
    %v337 = vmul.f32 %v330, %v297
    %v338 = vmul.f32 %v334, %v298
    %v339 = vlaneseq
    %v340 = vshrl.u32 %v339, 7
    %v341 = vsub.s32 0, %v340
    %v342 = vrot.slane %v165, %v341
    %v343 = vlaneseq
    %v344 = vshrl.u32 %v343, 7
    %v345 = vsub.s32 0, %v344
    %v346 = vrot.slane %v166, %v345
    %v347 = vmul.f32 %v342, %v299
    %v348 = vmul.f32 %v346, %v300
    %v349 = vmul.f32 %v342, %v301
    %v350 = vmul.f32 %v346, %v302
    %v351 = vmul.f32 %v175, %v311
    %v352 = vmul.f32 %v176, %v312
    %v353 = vmul.f32 %v177, %v313
    %v354 = vmul.f32 %v178, %v314
    %v355 = vmul.f32 %v199, %v323
    %v356 = vmul.f32 %v200, %v324
    %v357 = vmul.f32 %v201, %v325
    %v358 = vmul.f32 %v202, %v326
    %v359 = vsub.f32 %v351, %v355
    %v360 = vsub.f32 %v352, %v356
    %v361 = vsub.f32 %v353, %v357
    %v362 = vsub.f32 %v354, %v358
    %v363 = vmul.f32 %v187, %v323
    %v364 = vmul.f32 %v188, %v324
    %v365 = vmul.f32 %v189, %v325
    %v366 = vmul.f32 %v190, %v326
    %v367 = vmul.f32 %v211, %v335
    %v368 = vmul.f32 %v212, %v336
    %v369 = vmul.f32 %v213, %v337
    %v370 = vmul.f32 %v214, %v338
    %v371 = vsub.f32 %v363, %v367
    %v372 = vsub.f32 %v364, %v368
    %v373 = vsub.f32 %v365, %v369
    %v374 = vsub.f32 %v366, %v370
    %v375 = vmul.f32 %v199, %v335
    %v376 = vmul.f32 %v200, %v336
    %v377 = vmul.f32 %v201, %v337
    %v378 = vmul.f32 %v202, %v338
    %v379 = vmul.f32 %v223, %v347
    %v380 = vmul.f32 %v224, %v348
    %v381 = vmul.f32 %v225, %v349
    %v382 = vmul.f32 %v226, %v350
    %v383 = vsub.f32 %v375, %v379
    %v384 = vsub.f32 %v376, %v380
    %v385 = vsub.f32 %v377, %v381
    %v386 = vsub.f32 %v378, %v382
    %v387 = vlaneseq
    %v388 = vshrl.u32 %v387, 7
    %v389 = vsub.s32 1, %v388
    %v390 = vrot.slane %v165, %v389
    %v391 = vlaneseq
    %v392 = vshrl.u32 %v391, 7
    %v393 = vsub.s32 1, %v392
    %v394 = vrot.slane %v166, %v393
    %v395 = vmul.f32 %v390, %v359
    %v396 = vmul.f32 %v394, %v360
    %v397 = vmul.f32 %v390, %v361
    %v398 = vmul.f32 %v394, %v362
    %v399 = vlaneseq
    %v400 = vshrl.u32 %v399, 7
    %v401 = vsub.s32 2, %v400
    %v402 = vrot.slane %v165, %v401
    %v403 = vlaneseq
    %v404 = vshrl.u32 %v403, 7
    %v405 = vsub.s32 2, %v404
    %v406 = vrot.slane %v166, %v405
    %v407 = vmul.f32 %v402, %v371
    %v408 = vmul.f32 %v406, %v372
    %v409 = vmul.f32 %v402, %v373
    %v410 = vmul.f32 %v406, %v374
    %v411 = vlaneseq
    %v412 = vshrl.u32 %v411, 7
    %v413 = vsub.s32 3, %v412
    %v414 = vrot.slane %v165, %v413
    %v415 = vlaneseq
    %v416 = vshrl.u32 %v415, 7
    %v417 = vsub.s32 3, %v416
    %v418 = vrot.slane %v166, %v417
    %v419 = vmul.f32 %v414, %v383
    %v420 = vmul.f32 %v418, %v384
    %v421 = vmul.f32 %v414, %v385
    %v422 = vmul.f32 %v418, %v386
    %v423 = vmul.f32 %v175, %v395
    %v424 = vmul.f32 %v176, %v396
    %v425 = vmul.f32 %v177, %v397
    %v426 = vmul.f32 %v178, %v398
    %v427 = vmul.f32 %v211, %v407
    %v428 = vmul.f32 %v212, %v408
    %v429 = vmul.f32 %v213, %v409
    %v430 = vmul.f32 %v214, %v410
    %v431 = vsub.f32 %v423, %v427
    %v432 = vsub.f32 %v424, %v428
    %v433 = vsub.f32 %v425, %v429
    %v434 = vsub.f32 %v426, %v430
    %v435 = vmul.f32 %v187, %v407
    %v436 = vmul.f32 %v188, %v408
    %v437 = vmul.f32 %v189, %v409
    %v438 = vmul.f32 %v190, %v410
    %v439 = vmul.f32 %v223, %v419
    %v440 = vmul.f32 %v224, %v420
    %v441 = vmul.f32 %v225, %v421
    %v442 = vmul.f32 %v226, %v422
    %v443 = vsub.f32 %v435, %v439
    %v444 = vsub.f32 %v436, %v440
    %v445 = vsub.f32 %v437, %v441
    %v446 = vsub.f32 %v438, %v442
    %v447 = vlaneseq
    %v448 = vshrl.u32 %v447, 7
    %v449 = vsub.s32 4, %v448
    %v450 = vrot.slane %v165, %v449
    %v451 = vlaneseq
    %v452 = vshrl.u32 %v451, 7
    %v453 = vsub.s32 4, %v452
    %v454 = vrot.slane %v166, %v453
    %v455 = vmul.f32 %v450, %v431
    %v456 = vmul.f32 %v454, %v432
    %v457 = vmul.f32 %v450, %v433
    %v458 = vmul.f32 %v454, %v434
    %v459 = vlaneseq
    %v460 = vshrl.u32 %v459, 7
    %v461 = vsub.s32 5, %v460
    %v462 = vrot.slane %v165, %v461
    %v463 = vlaneseq
    %v464 = vshrl.u32 %v463, 7
    %v465 = vsub.s32 5, %v464
    %v466 = vrot.slane %v166, %v465
    %v467 = vmul.f32 %v462, %v443
    %v468 = vmul.f32 %v466, %v444
    %v469 = vmul.f32 %v462, %v445
    %v470 = vmul.f32 %v466, %v446
    %v471 = vmul.f32 %v175, %v455
    %v472 = vmul.f32 %v176, %v456
    %v473 = vmul.f32 %v177, %v457
    %v474 = vmul.f32 %v178, %v458
    %v475 = vmul.f32 %v223, %v467
    %v476 = vmul.f32 %v224, %v468
    %v477 = vmul.f32 %v225, %v469
    %v478 = vmul.f32 %v226, %v470
    %v479 = vsub.f32 %v471, %v475
    %v480 = vsub.f32 %v472, %v476
    %v481 = vsub.f32 %v473, %v477
    %v482 = vsub.f32 %v474, %v478
    %v483 = vld [vmem:[#allocation8] sm:$0xff]
    %v484 = vld [vmem:[#allocation8 + $0x8] sm:$0xff]
    %v485 = vld [vmem:[#allocation8 + $0x10] sm:$0xff]
    %v486 = vld [vmem:[#allocation8 + $0x18] sm:$0xff]
    %v487 = vld [vmem:[#allocation8 + $0x20] sm:$0xff]
    %v488 = vld [vmem:[#allocation8 + $0x28] sm:$0xff]
    %v489 = vld [vmem:[#allocation8 + $0x30] sm:$0xff]
    %v490 = vld [vmem:[#allocation8 + $0x38] sm:$0xff]
    %v491 = vld [vmem:[#allocation8 + $0x40] sm:$0xff]
    %v492 = vld [vmem:[#allocation8 + $0x48] sm:$0xff]
    %v493 = vld [vmem:[#allocation8 + $0x50] sm:$0xff]
    %v494 = vld [vmem:[#allocation8 + $0x58] sm:$0xff]
    %v495 = vld [vmem:[#allocation8 + $0x60] sm:$0xff]
    %v496 = vld [vmem:[#allocation8 + $0x68] sm:$0xff]
    %v497 = vld [vmem:[#allocation8 + $0x70] sm:$0xff]
    %v498 = vld [vmem:[#allocation8 + $0x78] sm:$0xff]
    %v499 = vld [vmem:[#allocation8 + $0x80] sm:$0xff]
    %v500 = vld [vmem:[#allocation8 + $0x88] sm:$0xff]
    %v501 = vld [vmem:[#allocation8 + $0x90] sm:$0xff]
    %v502 = vld [vmem:[#allocation8 + $0x98] sm:$0xff]
    %v503 = vld [vmem:[#allocation8 + $0xa0] sm:$0xff]
    %v504 = vld [vmem:[#allocation8 + $0xa8] sm:$0xff]
    %v505 = vld [vmem:[#allocation8 + $0xb0] sm:$0xff]
    %v506 = vld [vmem:[#allocation8 + $0xb8] sm:$0xff]
    %v507 = vld [vmem:[#allocation8 + $0xc0] sm:$0xff]
    %v508 = vld [vmem:[#allocation8 + $0xc8] sm:$0xff]
    %v509 = vld [vmem:[#allocation8 + $0xd0] sm:$0xff]
    %v510 = vld [vmem:[#allocation8 + $0xd8] sm:$0xff]
    %v511 = vld [vmem:[#allocation8 + $0xe0] sm:$0xff]
    %v512 = vld [vmem:[#allocation8 + $0xe8] sm:$0xff]
    %v513 = vld [vmem:[#allocation8 + $0xf0] sm:$0xff]
    %v514 = vld [vmem:[#allocation8 + $0xf8] sm:$0xff]
    %515 = vmatprep.subr.mxu0 0.0
    %516 = vmatpush1.msra.mxu0 %v483
    %517 = vmatprep.subr.mxu0 0.0
    %518 = vmatpush1.msra.mxu0 %v484
    %519 = vmatprep.subr.mxu0 0.0
    %520 = vmatpush1.msra.mxu0 %v485
    %521 = vmatprep.subr.mxu0 0.0
    %522 = vmatpush1.msra.mxu0 %v486
    %523 = vmatprep.subr.mxu0 0.0
    %524 = vmatpush1.msra.mxu0 %v487
    %525 = vmatprep.subr.mxu0 0.0
    %526 = vmatpush1.msra.mxu0 %v488
    %527 = vmatprep.subr.mxu0 0.0
    %528 = vmatpush1.msra.mxu0 %v489
    %529 = vmatprep.subr.mxu0 0.0
    %530 = vmatpush1.msra.mxu0 %v490
    %531 = vmatprep.subr.mxu0 0.0
    %532 = vmatpush1.msra.mxu0 %v491
    %533 = vmatprep.subr.mxu0 0.0
    %534 = vmatpush1.msra.mxu0 %v492
    %535 = vmatprep.subr.mxu0 0.0
    %536 = vmatpush1.msra.mxu0 %v493
    %537 = vmatprep.subr.mxu0 0.0
    %538 = vmatpush1.msra.mxu0 %v494
    %539 = vmatprep.subr.mxu0 0.0
    %540 = vmatpush1.msra.mxu0 %v495
    %541 = vmatprep.subr.mxu0 0.0
    %542 = vmatpush1.msra.mxu0 %v496
    %543 = vmatprep.subr.mxu0 0.0
    %544 = vmatpush1.msra.mxu0 %v497
    %545 = vmatprep.subr.mxu0 0.0
    %546 = vmatpush1.msra.mxu0 %v498
    %547 = vmatprep.subr.mxu0 0.0
    %548 = vmatpush1.msra.mxu0 %v499
    %549 = vmatprep.subr.mxu0 0.0
    %550 = vmatpush1.msra.mxu0 %v500
    %551 = vmatprep.subr.mxu0 0.0
    %552 = vmatpush1.msra.mxu0 %v501
    %553 = vmatprep.subr.mxu0 0.0
    %554 = vmatpush1.msra.mxu0 %v502
    %555 = vmatprep.subr.mxu0 0.0
    %556 = vmatpush1.msra.mxu0 %v503
    %557 = vmatprep.subr.mxu0 0.0
    %558 = vmatpush1.msra.mxu0 %v504
    %559 = vmatprep.subr.mxu0 0.0
    %560 = vmatpush1.msra.mxu0 %v505
    %561 = vmatprep.subr.mxu0 0.0
    %562 = vmatpush1.msra.mxu0 %v506
    %563 = vmatprep.subr.mxu0 0.0
    %564 = vmatpush1.msra.mxu0 %v507
    %565 = vmatprep.subr.mxu0 0.0
    %566 = vmatpush1.msra.mxu0 %v508
    %567 = vmatprep.subr.mxu0 0.0
    %568 = vmatpush1.msra.mxu0 %v509
    %569 = vmatprep.subr.mxu0 0.0
    %570 = vmatpush1.msra.mxu0 %v510
    %571 = vmatprep.subr.mxu0 0.0
    %572 = vmatpush1.msra.mxu0 %v511
    %573 = vmatprep.subr.mxu0 0.0
    %574 = vmatpush1.msra.mxu0 %v512
    %575 = vmatprep.subr.mxu0 0.0
    %576 = vmatpush1.msra.mxu0 %v513
    %577 = vmatprep.subr.mxu0 0.0
    %578 = vmatpush1.msra.mxu0 %v514
    %579 = vmatprep.mubr.f32.mxu0 %v480
    %580 = vmatmul.mubr.f32.gmra.mrb[0].mxu0 %v479
    %v581 = vpop.f32.mrb[0].mxu0
    %v582 = vadd.f32 0.0, %v581
    %v583 = vpop.f32.mrb[0].mxu0
    %584 = vmatprep.mubr.f32.mxu0 %v482
    %585 = vmatmul.mubr.f32.gmra.mrb[0].mxu0 %v481
    %v586 = vpop.f32.mrb[0].mxu0
    %v587 = vadd.f32 0.0, %v586
    %v588 = vpop.f32.mrb[0].mxu0
    %589 = vdwg.mxu0
    %590 = vst [vmem:[#allocation10] sm:$0xff] %v582
    %591 = vst [vmem:[#allocation10 + $0x8] sm:$0xff] %v587
    // Predicated region
    $region34: #{tpu_custom_call.1} parent=1 // pred_check
      _
    $region35: #{tpu_custom_call.1} parent=1 // pred_check_branch
      %593 = sbr.rel (0) target = $region37
    $region36: #{tpu_custom_call.1} parent=1 // pred_region
      %s595 = ssub.s32 256, 256
      %596 = vsyncadd [#allocation4], %s595
      %s597 = sshll.u32 [#allocation10], 4
      %s598 = int_to_ptr.vmem [resolvable:$true] %s597
      %603 = dma.vmem_to_hbm [thread:$0]  %s598, 256, %s4, [#allocation4], 128, 128, 8
    $region37: #{tpu_custom_call.1} parent=1 // pred_fallthru
      _
    // Predicated region
    $region38: #{tpu_custom_call.1} parent=1 // pred_check
      _
    $region39: #{tpu_custom_call.1} parent=1 // pred_check_branch
      %605 = sbr.rel (0) target = $region41
    $region40: #{tpu_custom_call.1} parent=1 // pred_region
      %606 = dma.done [#allocation4], 256
    $region41: #{tpu_custom_call.1} parent=1 // pred_fallthru
      _
    %607 = vsyncpa [#allocation3], 1
    %608 = vsyncpa [#allocation6], 1
    %609 = vsyncpa [#allocation9], 1
    %610 = vsyncpa [#allocation4], 1

// kernel: tpu_custom_call.1
$region0: #{tpu_custom_call.1}
  #allocation0 [shape = 'u32[]', space=smem, size = 0x4, offset = 0x4, fixed_abs, tag = 'smem constant byte address 0x4 - core index']
  #allocation1 [shape = 'u32[144,128]{1,0:T(1,128)}', space=vmem, size = 0x12000, scoped, tag = 'internal scratch']
  %s0 = inlined_call_operand.hbm [shape: f32[16,16], index: 0, kind: input, shape index: {}]
  %s1 = inlined_call_operand.hbm [shape: f32[16,256], index: 1, kind: input, shape index: {}]
  %s2 = inlined_call_operand.hbm [shape: f32[14,256], index: 2, kind: input, shape index: {}]
  %s3 = inlined_call_operand.hbm [shape: f32[256,128], index: 3, kind: input, shape index: {}]
  %s4 = inlined_call_operand.hbm [shape: f32[16,128], index: 4, kind: output, shape index: {}]
  %s5 = sld [smem:[#allocation0]]
  $region42: #{tpu_custom_call.1} parent=0
    _
  %s7 = ssub.s32 1, %s5
  %s8 = scalar_select 0, %s7, %s5
  $region1: #{tpu_custom_call.1} parent=0
    #allocation2 [shape = 'u8[8192]{0}', space=vmem, size = 0x2000, scoped, tag = 'input window, operand 0, single buffered']
    #allocation3 [shape = 's32[1]{0}', space=sflag, size = 0x4, scoped, tag = 'scoped memory for tpu_custom_call.1']
    #allocation4 [shape = 's32[1]{0}', space=sflag, size = 0x4, scoped, tag = 'scoped memory for tpu_custom_call.1']
    #allocation5 [shape = 'u8[16384]{0}', space=vmem, size = 0x4000, scoped, tag = 'input window, operand 1, single buffered']
    #allocation6 [shape = 's32[1]{0}', space=sflag, size = 0x4, scoped, tag = 'scoped memory for tpu_custom_call.1']
    #allocation7 [shape = 'u8[16384]{0}', space=vmem, size = 0x4000, scoped, tag = 'input window, operand 2, single buffered']
    #allocation8 [shape = 'u8[131072]{0}', space=vmem, size = 0x20000, scoped, tag = 'input window, operand 3, single buffered']
    #allocation9 [shape = 's32[1]{0}', space=sflag, size = 0x4, scoped, tag = 'scoped memory for tpu_custom_call.1']
    #allocation10 [shape = 'u8[8192]{0}', space=vmem, size = 0x2000, scoped, tag = 'output window, operand 0, single buffered']
    %9 = vsyncpa [#allocation3], 0
    %10 = vsyncpa [#allocation6], 0
    %11 = vsyncpa [#allocation9], 0
    %12 = vsyncpa [#allocation4], 0
    // Predicated region
    $region2: #{tpu_custom_call.1} parent=1 // pred_check
      _
    $region3: #{tpu_custom_call.1} parent=1 // pred_check_branch
      %14 = sbr.rel (0) target = $region5
    $region4: #{tpu_custom_call.1} parent=1 // pred_region
      %s16 = ssub.s32 256, 256
      %17 = vsyncadd [#allocation3], %s16
      %s18 = sshll.u32 [#allocation2], 4
      %s19 = int_to_ptr.vmem [resolvable:$true] %s18
      %24 = dma.hbm_to_vmem [thread:$0]  %s0, 256, %s19, [#allocation3], 128, 128, 8
    $region5: #{tpu_custom_call.1} parent=1 // pred_fallthru
      _
    // Predicated region
    $region6: #{tpu_custom_call.1} parent=1 // pred_check
      _
    $region7: #{tpu_custom_call.1} parent=1 // pred_check_branch
      %26 = sbr.rel (0) target = $region9
    $region8: #{tpu_custom_call.1} parent=1 // pred_region
      %s28 = ssub.s32 512, 512
      %29 = vsyncadd [#allocation6], %s28
      %s30 = sshll.u32 [#allocation5], 4
      %s31 = int_to_ptr.vmem [resolvable:$true] %s30
      %36 = dma.hbm_to_vmem [thread:$0]  %s1, 512, %s31, [#allocation6], 256, 256, 16
    $region9: #{tpu_custom_call.1} parent=1 // pred_fallthru
      _
    // Predicated region
    $region10: #{tpu_custom_call.1} parent=1 // pred_check
      _
    $region11: #{tpu_custom_call.1} parent=1 // pred_check_branch
      %38 = sbr.rel (0) target = $region13
    $region12: #{tpu_custom_call.1} parent=1 // pred_region
      %s40 = ssub.s32 512, 512
      %41 = vsyncadd [#allocation6], %s40
      %s42 = sshll.u32 [#allocation7], 4
      %s43 = int_to_ptr.vmem [resolvable:$true] %s42
      %48 = dma.hbm_to_vmem [thread:$0]  %s2, 512, %s43, [#allocation6], 256, 256, 16
    $region13: #{tpu_custom_call.1} parent=1 // pred_fallthru
      _
    // Predicated region
    $region14: #{tpu_custom_call.1} parent=1 // pred_check
      _
    $region15: #{tpu_custom_call.1} parent=1 // pred_check_branch
      %50 = sbr.rel (0) target = $region17
    $region16: #{tpu_custom_call.1} parent=1 // pred_region
      %s52 = ssub.s32 4096, 4096
      %53 = vsyncadd [#allocation9], %s52
      %s54 = sshll.u32 [#allocation8], 4
      %s55 = int_to_ptr.vmem [resolvable:$true] %s54
      %60 = dma.hbm_to_vmem [thread:$0]  %s3, 4096, %s55, [#allocation9], 128, 128, 8
    $region17: #{tpu_custom_call.1} parent=1 // pred_fallthru
      _
    // Predicated region
    $region18: #{tpu_custom_call.1} parent=1 // pred_check
      _
    $region19: #{tpu_custom_call.1} parent=1 // pred_check_branch
      %62 = sbr.rel (0) target = $region21
    $region20: #{tpu_custom_call.1} parent=1 // pred_region
      %63 = dma.done [#allocation3], 256
    $region21: #{tpu_custom_call.1} parent=1 // pred_fallthru
      _
    // Predicated region
    $region22: #{tpu_custom_call.1} parent=1 // pred_check
      _
    $region23: #{tpu_custom_call.1} parent=1 // pred_check_branch
      %65 = sbr.rel (0) target = $region25
    $region24: #{tpu_custom_call.1} parent=1 // pred_region
      %66 = dma.done [#allocation6], 512
    $region25: #{tpu_custom_call.1} parent=1 // pred_fallthru
      _
    // Predicated region
    $region26: #{tpu_custom_call.1} parent=1 // pred_check
      _
    $region27: #{tpu_custom_call.1} parent=1 // pred_check_branch
      %68 = sbr.rel (0) target = $region29
    $region28: #{tpu_custom_call.1} parent=1 // pred_region
      %69 = dma.done [#allocation6], 512
    $region29: #{tpu_custom_call.1} parent=1 // pred_fallthru
      _
    // Predicated region
    $region30: #{tpu_custom_call.1} parent=1 // pred_check
      _
    $region31: #{tpu_custom_call.1} parent=1 // pred_check_branch
      %71 = sbr.rel (0) target = $region33
    $region32: #{tpu_custom_call.1} parent=1 // pred_region
      %72 = dma.done [#allocation9], 4096
    $region33: #{tpu_custom_call.1} parent=1 // pred_fallthru
      _
    %v73 = vld [vmem:[#allocation2] sm:$0xff]
    %v74 = vld [vmem:[#allocation2 + $0x8] sm:$0xff]
    %v75 = vld [vmem:[#allocation5] sm:$0xff]
    %v76 = vld [vmem:[#allocation5 + $0x8] sm:$0xff]
    %v77 = vld [vmem:[#allocation5 + $0x10] sm:$0xff]
    %v78 = vld [vmem:[#allocation5 + $0x18] sm:$0xff]
    %vm79 = vcmask 130048
    %v81 = vsel %vm79, %v73, 0
    %v84 = vsel %vm79, %v74, 0
    %86 = vmatprep.subr.mxu0 %v76
    %87 = vmatpush1.msra.mxu0 %v75
    %88 = vmatprep.subr.mxu0 %v78
    %89 = vmatpush1.msra.mxu0 %v77
    %90 = vmatprep.subr.mxu0 0.0
    %91 = vmatpush1.msra.mxu0 0.0
    %92 = vmatprep.subr.mxu0 0.0
    %93 = vmatpush1.msra.mxu0 0.0
    %94 = vmatprep.subr.mxu0 0.0
    %95 = vmatpush1.msra.mxu0 0.0
    %96 = vmatprep.subr.mxu0 0.0
    %97 = vmatpush1.msra.mxu0 0.0
    %98 = vmatprep.subr.mxu0 0.0
    %99 = vmatpush1.msra.mxu0 0.0
    %100 = vmatprep.subr.mxu0 0.0
    %101 = vmatpush1.msra.mxu0 0.0
    %102 = vmatprep.subr.mxu0 0.0
    %103 = vmatpush1.msra.mxu0 0.0
    %104 = vmatprep.subr.mxu0 0.0
    %105 = vmatpush1.msra.mxu0 0.0
    %106 = vmatprep.subr.mxu0 0.0
    %107 = vmatpush1.msra.mxu0 0.0
    %108 = vmatprep.subr.mxu0 0.0
    %109 = vmatpush1.msra.mxu0 0.0
    %110 = vmatprep.subr.mxu0 0.0
    %111 = vmatpush1.msra.mxu0 0.0
    %112 = vmatprep.subr.mxu0 0.0
    %113 = vmatpush1.msra.mxu0 0.0
    %114 = vmatprep.subr.mxu0 0.0
    %115 = vmatpush1.msra.mxu0 0.0
    %116 = vmatprep.subr.mxu0 0.0
    %117 = vmatpush1.msra.mxu0 0.0
    %118 = vmatprep.subr.mxu0 0.0
    %119 = vmatpush1.msra.mxu0 0.0
    %120 = vmatprep.subr.mxu0 0.0
    %121 = vmatpush1.msra.mxu0 0.0
    %122 = vmatprep.subr.mxu0 0.0
    %123 = vmatpush1.msra.mxu0 0.0
    %124 = vmatprep.subr.mxu0 0.0
    %125 = vmatpush1.msra.mxu0 0.0
    %126 = vmatprep.subr.mxu0 0.0
    %127 = vmatpush1.msra.mxu0 0.0
    %128 = vmatprep.subr.mxu0 0.0
    %129 = vmatpush1.msra.mxu0 0.0
    %130 = vmatprep.subr.mxu0 0.0
    %131 = vmatpush1.msra.mxu0 0.0
    %132 = vmatprep.subr.mxu0 0.0
    %133 = vmatpush1.msra.mxu0 0.0
    %134 = vmatprep.subr.mxu0 0.0
    %135 = vmatpush1.msra.mxu0 0.0
    %136 = vmatprep.subr.mxu0 0.0
    %137 = vmatpush1.msra.mxu0 0.0
    %138 = vmatprep.subr.mxu0 0.0
    %139 = vmatpush1.msra.mxu0 0.0
    %140 = vmatprep.subr.mxu0 0.0
    %141 = vmatpush1.msra.mxu0 0.0
    %142 = vmatprep.subr.mxu0 0.0
    %143 = vmatpush1.msra.mxu0 0.0
    %144 = vmatprep.subr.mxu0 0.0
    %145 = vmatpush1.msra.mxu0 0.0
    %146 = vmatprep.subr.mxu0 0.0
    %147 = vmatpush1.msra.mxu0 0.0
    %148 = vmatprep.subr.mxu0 0.0
    %149 = vmatpush1.msra.mxu0 0.0
    %150 = vmatprep.mubr.f32.mxu0 0.0
    %151 = vmatmul.mubr.f32.gmra.mrb[0].mxu0 %v81
    %v152 = vpop.f32.mrb[0].mxu0
    %v153 = vadd.f32 0.0, %v152
    %v154 = vpop.f32.mrb[0].mxu0
    %v155 = vadd.f32 0.0, %v154
    %156 = vmatprep.mubr.f32.mxu0 0.0
    %157 = vmatmul.mubr.f32.gmra.mrb[0].mxu0 %v84
    %v158 = vpop.f32.mrb[0].mxu0
    %v159 = vadd.f32 0.0, %v158
    %v160 = vpop.f32.mrb[0].mxu0
    %v161 = vadd.f32 0.0, %v160
    %162 = vdwg.mxu0
    %v163 = vld [vmem:[#allocation7] sm:$0xff]
    %v164 = vld [vmem:[#allocation7 + $0x8] sm:$0xff]
    %v165 = vld [vmem:[#allocation7 + $0x10] sm:$0x3f]
    %v166 = vld [vmem:[#allocation7 + $0x18] sm:$0x3f]
    %v167 = vlaneseq
    %v168 = vshrl.u32 %v167, 7
    %v169 = vsub.s32 0, %v168
    %v170 = vrot.slane %v163, %v169
    %v171 = vlaneseq
    %v172 = vshrl.u32 %v171, 7
    %v173 = vsub.s32 0, %v172
    %v174 = vrot.slane %v164, %v173
    %v175 = vsub.f32 %v153, %v170
    %v176 = vsub.f32 %v155, %v174
    %v177 = vsub.f32 %v159, %v170
    %v178 = vsub.f32 %v161, %v174
    %v179 = vlaneseq
    %v180 = vshrl.u32 %v179, 7
    %v181 = vsub.s32 1, %v180
    %v182 = vrot.slane %v163, %v181
    %v183 = vlaneseq
    %v184 = vshrl.u32 %v183, 7
    %v185 = vsub.s32 1, %v184
    %v186 = vrot.slane %v164, %v185
    %v187 = vsub.f32 %v153, %v182
    %v188 = vsub.f32 %v155, %v186
    %v189 = vsub.f32 %v159, %v182
    %v190 = vsub.f32 %v161, %v186
    %v191 = vlaneseq
    %v192 = vshrl.u32 %v191, 7
    %v193 = vsub.s32 2, %v192
    %v194 = vrot.slane %v163, %v193
    %v195 = vlaneseq
    %v196 = vshrl.u32 %v195, 7
    %v197 = vsub.s32 2, %v196
    %v198 = vrot.slane %v164, %v197
    %v199 = vsub.f32 %v153, %v194
    %v200 = vsub.f32 %v155, %v198
    %v201 = vsub.f32 %v159, %v194
    %v202 = vsub.f32 %v161, %v198
    %v203 = vlaneseq
    %v204 = vshrl.u32 %v203, 7
    %v205 = vsub.s32 3, %v204
    %v206 = vrot.slane %v163, %v205
    %v207 = vlaneseq
    %v208 = vshrl.u32 %v207, 7
    %v209 = vsub.s32 3, %v208
    %v210 = vrot.slane %v164, %v209
    %v211 = vsub.f32 %v153, %v206
    %v212 = vsub.f32 %v155, %v210
    %v213 = vsub.f32 %v159, %v206
    %v214 = vsub.f32 %v161, %v210
    %v215 = vlaneseq
    %v216 = vshrl.u32 %v215, 7
    %v217 = vsub.s32 4, %v216
    %v218 = vrot.slane %v163, %v217
    %v219 = vlaneseq
    %v220 = vshrl.u32 %v219, 7
    %v221 = vsub.s32 4, %v220
    %v222 = vrot.slane %v164, %v221
    %v223 = vsub.f32 %v153, %v218
    %v224 = vsub.f32 %v155, %v222
    %v225 = vsub.f32 %v159, %v218
    %v226 = vsub.f32 %v161, %v222
    %vm227 = vcmp.ge.f32.partialorder %v175, 0.0
    %vm228 = vcmp.ge.f32.partialorder %v176, 0.0
    %vm229 = vcmp.ge.f32.partialorder %v177, 0.0
    %vm230 = vcmp.ge.f32.partialorder %v178, 0.0
    %v231 = vsel %vm227, 1, 0
    %v232 = vsel %vm228, 1, 0
    %v233 = vsel %vm229, 1, 0
    %v234 = vsel %vm230, 1, 0
    %v235 = vcvt.s32.f32 %v231
    %v236 = vcvt.s32.f32 %v232
    %v237 = vcvt.s32.f32 %v233
    %v238 = vcvt.s32.f32 %v234
    %vm239 = vcmp.ge.f32.partialorder %v187, 0.0
    %vm240 = vcmp.ge.f32.partialorder %v188, 0.0
    %vm241 = vcmp.ge.f32.partialorder %v189, 0.0
    %vm242 = vcmp.ge.f32.partialorder %v190, 0.0
    %v243 = vsel %vm239, 1, 0
    %v244 = vsel %vm240, 1, 0
    %v245 = vsel %vm241, 1, 0
    %v246 = vsel %vm242, 1, 0
    %v247 = vcvt.s32.f32 %v243
    %v248 = vcvt.s32.f32 %v244
    %v249 = vcvt.s32.f32 %v245
    %v250 = vcvt.s32.f32 %v246
    %vm251 = vcmp.ge.f32.partialorder %v199, 0.0
    %vm252 = vcmp.ge.f32.partialorder %v200, 0.0
    %vm253 = vcmp.ge.f32.partialorder %v201, 0.0
    %vm254 = vcmp.ge.f32.partialorder %v202, 0.0
    %v255 = vsel %vm251, 1, 0
    %v256 = vsel %vm252, 1, 0
    %v257 = vsel %vm253, 1, 0
    %v258 = vsel %vm254, 1, 0
    %v259 = vcvt.s32.f32 %v255
    %v260 = vcvt.s32.f32 %v256
    %v261 = vcvt.s32.f32 %v257
    %v262 = vcvt.s32.f32 %v258
    %vm263 = vcmp.ge.f32.partialorder %v211, 0.0
    %vm264 = vcmp.ge.f32.partialorder %v212, 0.0
    %vm265 = vcmp.ge.f32.partialorder %v213, 0.0
    %vm266 = vcmp.ge.f32.partialorder %v214, 0.0
    %v267 = vsel %vm263, 1, 0
    %v268 = vsel %vm264, 1, 0
    %v269 = vsel %vm265, 1, 0
    %v270 = vsel %vm266, 1, 0
    %v271 = vcvt.s32.f32 %v267
    %v272 = vcvt.s32.f32 %v268
    %v273 = vcvt.s32.f32 %v269
    %v274 = vcvt.s32.f32 %v270
    %vm275 = vcmp.ge.f32.partialorder %v223, 0.0
    %vm276 = vcmp.ge.f32.partialorder %v224, 0.0
    %vm277 = vcmp.ge.f32.partialorder %v225, 0.0
    %vm278 = vcmp.ge.f32.partialorder %v226, 0.0
    %v279 = vsel %vm275, 1, 0
    %v280 = vsel %vm276, 1, 0
    %v281 = vsel %vm277, 1, 0
    %v282 = vsel %vm278, 1, 0
    %v283 = vcvt.s32.f32 %v279
    %v284 = vcvt.s32.f32 %v280
    %v285 = vcvt.s32.f32 %v281
    %v286 = vcvt.s32.f32 %v282
    %v287 = vsub.f32 %v235, %v247
    %v288 = vsub.f32 %v236, %v248
    %v289 = vsub.f32 %v237, %v249
    %v290 = vsub.f32 %v238, %v250
    %v291 = vsub.f32 %v247, %v259
    %v292 = vsub.f32 %v248, %v260
    %v293 = vsub.f32 %v249, %v261
    %v294 = vsub.f32 %v250, %v262
    %v295 = vsub.f32 %v259, %v271
    %v296 = vsub.f32 %v260, %v272
    %v297 = vsub.f32 %v261, %v273
    %v298 = vsub.f32 %v262, %v274
    %v299 = vsub.f32 %v271, %v283
    %v300 = vsub.f32 %v272, %v284
    %v301 = vsub.f32 %v273, %v285
    %v302 = vsub.f32 %v274, %v286
    %v303 = vlaneseq
    %v304 = vshrl.u32 %v303, 7
    %v305 = vsub.s32 5, %v304
    %v306 = vrot.slane %v163, %v305
    %v307 = vlaneseq
    %v308 = vshrl.u32 %v307, 7
    %v309 = vsub.s32 5, %v308
    %v310 = vrot.slane %v164, %v309
    %v311 = vmul.f32 %v306, %v287
    %v312 = vmul.f32 %v310, %v288
    %v313 = vmul.f32 %v306, %v289
    %v314 = vmul.f32 %v310, %v290
    %v315 = vlaneseq
    %v316 = vshrl.u32 %v315, 7
    %v317 = vsub.s32 6, %v316
    %v318 = vrot.slane %v163, %v317
    %v319 = vlaneseq
    %v320 = vshrl.u32 %v319, 7
    %v321 = vsub.s32 6, %v320
    %v322 = vrot.slane %v164, %v321
    %v323 = vmul.f32 %v318, %v291
    %v324 = vmul.f32 %v322, %v292
    %v325 = vmul.f32 %v318, %v293
    %v326 = vmul.f32 %v322, %v294
    %v327 = vlaneseq
    %v328 = vshrl.u32 %v327, 7
    %v329 = vsub.s32 7, %v328
    %v330 = vrot.slane %v163, %v329
    %v331 = vlaneseq
    %v332 = vshrl.u32 %v331, 7
    %v333 = vsub.s32 7, %v332
    %v334 = vrot.slane %v164, %v333
    %v335 = vmul.f32 %v330, %v295
    %v336 = vmul.f32 %v334, %v296
    %v337 = vmul.f32 %v330, %v297
    %v338 = vmul.f32 %v334, %v298
    %v339 = vlaneseq
    %v340 = vshrl.u32 %v339, 7
    %v341 = vsub.s32 0, %v340
    %v342 = vrot.slane %v165, %v341
    %v343 = vlaneseq
    %v344 = vshrl.u32 %v343, 7
    %v345 = vsub.s32 0, %v344
    %v346 = vrot.slane %v166, %v345
    %v347 = vmul.f32 %v342, %v299
    %v348 = vmul.f32 %v346, %v300
    %v349 = vmul.f32 %v342, %v301
    %v350 = vmul.f32 %v346, %v302
    %v351 = vmul.f32 %v175, %v311
    %v352 = vmul.f32 %v176, %v312
    %v353 = vmul.f32 %v177, %v313
    %v354 = vmul.f32 %v178, %v314
    %v355 = vmul.f32 %v199, %v323
    %v356 = vmul.f32 %v200, %v324
    %v357 = vmul.f32 %v201, %v325
    %v358 = vmul.f32 %v202, %v326
    %v359 = vsub.f32 %v351, %v355
    %v360 = vsub.f32 %v352, %v356
    %v361 = vsub.f32 %v353, %v357
    %v362 = vsub.f32 %v354, %v358
    %v363 = vmul.f32 %v187, %v323
    %v364 = vmul.f32 %v188, %v324
    %v365 = vmul.f32 %v189, %v325
    %v366 = vmul.f32 %v190, %v326
    %v367 = vmul.f32 %v211, %v335
    %v368 = vmul.f32 %v212, %v336
    %v369 = vmul.f32 %v213, %v337
    %v370 = vmul.f32 %v214, %v338
    %v371 = vsub.f32 %v363, %v367
    %v372 = vsub.f32 %v364, %v368
    %v373 = vsub.f32 %v365, %v369
    %v374 = vsub.f32 %v366, %v370
    %v375 = vmul.f32 %v199, %v335
    %v376 = vmul.f32 %v200, %v336
    %v377 = vmul.f32 %v201, %v337
    %v378 = vmul.f32 %v202, %v338
    %v379 = vmul.f32 %v223, %v347
    %v380 = vmul.f32 %v224, %v348
    %v381 = vmul.f32 %v225, %v349
    %v382 = vmul.f32 %v226, %v350
    %v383 = vsub.f32 %v375, %v379
    %v384 = vsub.f32 %v376, %v380
    %v385 = vsub.f32 %v377, %v381
    %v386 = vsub.f32 %v378, %v382
    %v387 = vlaneseq
    %v388 = vshrl.u32 %v387, 7
    %v389 = vsub.s32 1, %v388
    %v390 = vrot.slane %v165, %v389
    %v391 = vlaneseq
    %v392 = vshrl.u32 %v391, 7
    %v393 = vsub.s32 1, %v392
    %v394 = vrot.slane %v166, %v393
    %v395 = vmul.f32 %v390, %v359
    %v396 = vmul.f32 %v394, %v360
    %v397 = vmul.f32 %v390, %v361
    %v398 = vmul.f32 %v394, %v362
    %v399 = vlaneseq
    %v400 = vshrl.u32 %v399, 7
    %v401 = vsub.s32 2, %v400
    %v402 = vrot.slane %v165, %v401
    %v403 = vlaneseq
    %v404 = vshrl.u32 %v403, 7
    %v405 = vsub.s32 2, %v404
    %v406 = vrot.slane %v166, %v405
    %v407 = vmul.f32 %v402, %v371
    %v408 = vmul.f32 %v406, %v372
    %v409 = vmul.f32 %v402, %v373
    %v410 = vmul.f32 %v406, %v374
    %v411 = vlaneseq
    %v412 = vshrl.u32 %v411, 7
    %v413 = vsub.s32 3, %v412
    %v414 = vrot.slane %v165, %v413
    %v415 = vlaneseq
    %v416 = vshrl.u32 %v415, 7
    %v417 = vsub.s32 3, %v416
    %v418 = vrot.slane %v166, %v417
    %v419 = vmul.f32 %v414, %v383
    %v420 = vmul.f32 %v418, %v384
    %v421 = vmul.f32 %v414, %v385
    %v422 = vmul.f32 %v418, %v386
    %v423 = vmul.f32 %v175, %v395
    %v424 = vmul.f32 %v176, %v396
    %v425 = vmul.f32 %v177, %v397
    %v426 = vmul.f32 %v178, %v398
    %v427 = vmul.f32 %v211, %v407
    %v428 = vmul.f32 %v212, %v408
    %v429 = vmul.f32 %v213, %v409
    %v430 = vmul.f32 %v214, %v410
    %v431 = vsub.f32 %v423, %v427
    %v432 = vsub.f32 %v424, %v428
    %v433 = vsub.f32 %v425, %v429
    %v434 = vsub.f32 %v426, %v430
    %v435 = vmul.f32 %v187, %v407
    %v436 = vmul.f32 %v188, %v408
    %v437 = vmul.f32 %v189, %v409
    %v438 = vmul.f32 %v190, %v410
    %v439 = vmul.f32 %v223, %v419
    %v440 = vmul.f32 %v224, %v420
    %v441 = vmul.f32 %v225, %v421
    %v442 = vmul.f32 %v226, %v422
    %v443 = vsub.f32 %v435, %v439
    %v444 = vsub.f32 %v436, %v440
    %v445 = vsub.f32 %v437, %v441
    %v446 = vsub.f32 %v438, %v442
    %v447 = vlaneseq
    %v448 = vshrl.u32 %v447, 7
    %v449 = vsub.s32 4, %v448
    %v450 = vrot.slane %v165, %v449
    %v451 = vlaneseq
    %v452 = vshrl.u32 %v451, 7
    %v453 = vsub.s32 4, %v452
    %v454 = vrot.slane %v166, %v453
    %v455 = vmul.f32 %v450, %v431
    %v456 = vmul.f32 %v454, %v432
    %v457 = vmul.f32 %v450, %v433
    %v458 = vmul.f32 %v454, %v434
    %v459 = vlaneseq
    %v460 = vshrl.u32 %v459, 7
    %v461 = vsub.s32 5, %v460
    %v462 = vrot.slane %v165, %v461
    %v463 = vlaneseq
    %v464 = vshrl.u32 %v463, 7
    %v465 = vsub.s32 5, %v464
    %v466 = vrot.slane %v166, %v465
    %v467 = vmul.f32 %v462, %v443
    %v468 = vmul.f32 %v466, %v444
    %v469 = vmul.f32 %v462, %v445
    %v470 = vmul.f32 %v466, %v446
    %v471 = vmul.f32 %v175, %v455
    %v472 = vmul.f32 %v176, %v456
    %v473 = vmul.f32 %v177, %v457
    %v474 = vmul.f32 %v178, %v458
    %v475 = vmul.f32 %v223, %v467
    %v476 = vmul.f32 %v224, %v468
    %v477 = vmul.f32 %v225, %v469
    %v478 = vmul.f32 %v226, %v470
    %v479 = vsub.f32 %v471, %v475
    %v480 = vsub.f32 %v472, %v476
    %v481 = vsub.f32 %v473, %v477
    %v482 = vsub.f32 %v474, %v478
    %v483 = vld [vmem:[#allocation8] sm:$0xff]
    %v484 = vld [vmem:[#allocation8 + $0x8] sm:$0xff]
    %v485 = vld [vmem:[#allocation8 + $0x10] sm:$0xff]
    %v486 = vld [vmem:[#allocation8 + $0x18] sm:$0xff]
    %v487 = vld [vmem:[#allocation8 + $0x20] sm:$0xff]
    %v488 = vld [vmem:[#allocation8 + $0x28] sm:$0xff]
    %v489 = vld [vmem:[#allocation8 + $0x30] sm:$0xff]
    %v490 = vld [vmem:[#allocation8 + $0x38] sm:$0xff]
    %v491 = vld [vmem:[#allocation8 + $0x40] sm:$0xff]
    %v492 = vld [vmem:[#allocation8 + $0x48] sm:$0xff]
    %v493 = vld [vmem:[#allocation8 + $0x50] sm:$0xff]
    %v494 = vld [vmem:[#allocation8 + $0x58] sm:$0xff]
    %v495 = vld [vmem:[#allocation8 + $0x60] sm:$0xff]
    %v496 = vld [vmem:[#allocation8 + $0x68] sm:$0xff]
    %v497 = vld [vmem:[#allocation8 + $0x70] sm:$0xff]
    %v498 = vld [vmem:[#allocation8 + $0x78] sm:$0xff]
    %v499 = vld [vmem:[#allocation8 + $0x80] sm:$0xff]
    %v500 = vld [vmem:[#allocation8 + $0x88] sm:$0xff]
    %v501 = vld [vmem:[#allocation8 + $0x90] sm:$0xff]
    %v502 = vld [vmem:[#allocation8 + $0x98] sm:$0xff]
    %v503 = vld [vmem:[#allocation8 + $0xa0] sm:$0xff]
    %v504 = vld [vmem:[#allocation8 + $0xa8] sm:$0xff]
    %v505 = vld [vmem:[#allocation8 + $0xb0] sm:$0xff]
    %v506 = vld [vmem:[#allocation8 + $0xb8] sm:$0xff]
    %v507 = vld [vmem:[#allocation8 + $0xc0] sm:$0xff]
    %v508 = vld [vmem:[#allocation8 + $0xc8] sm:$0xff]
    %v509 = vld [vmem:[#allocation8 + $0xd0] sm:$0xff]
    %v510 = vld [vmem:[#allocation8 + $0xd8] sm:$0xff]
    %v511 = vld [vmem:[#allocation8 + $0xe0] sm:$0xff]
    %v512 = vld [vmem:[#allocation8 + $0xe8] sm:$0xff]
    %v513 = vld [vmem:[#allocation8 + $0xf0] sm:$0xff]
    %v514 = vld [vmem:[#allocation8 + $0xf8] sm:$0xff]
    %515 = vmatprep.subr.mxu0 0.0
    %516 = vmatpush1.msra.mxu0 %v483
    %517 = vmatprep.subr.mxu0 0.0
    %518 = vmatpush1.msra.mxu0 %v484
    %519 = vmatprep.subr.mxu0 0.0
    %520 = vmatpush1.msra.mxu0 %v485
    %521 = vmatprep.subr.mxu0 0.0
    %522 = vmatpush1.msra.mxu0 %v486
    %523 = vmatprep.subr.mxu0 0.0
    %524 = vmatpush1.msra.mxu0 %v487
    %525 = vmatprep.subr.mxu0 0.0
    %526 = vmatpush1.msra.mxu0 %v488
    %527 = vmatprep.subr.mxu0 0.0
    %528 = vmatpush1.msra.mxu0 %v489
    %529 = vmatprep.subr.mxu0 0.0
    %530 = vmatpush1.msra.mxu0 %v490
    %531 = vmatprep.subr.mxu0 0.0
    %532 = vmatpush1.msra.mxu0 %v491
    %533 = vmatprep.subr.mxu0 0.0
    %534 = vmatpush1.msra.mxu0 %v492
    %535 = vmatprep.subr.mxu0 0.0
    %536 = vmatpush1.msra.mxu0 %v493
    %537 = vmatprep.subr.mxu0 0.0
    %538 = vmatpush1.msra.mxu0 %v494
    %539 = vmatprep.subr.mxu0 0.0
    %540 = vmatpush1.msra.mxu0 %v495
    %541 = vmatprep.subr.mxu0 0.0
    %542 = vmatpush1.msra.mxu0 %v496
    %543 = vmatprep.subr.mxu0 0.0
    %544 = vmatpush1.msra.mxu0 %v497
    %545 = vmatprep.subr.mxu0 0.0
    %546 = vmatpush1.msra.mxu0 %v498
    %547 = vmatprep.subr.mxu0 0.0
    %548 = vmatpush1.msra.mxu0 %v499
    %549 = vmatprep.subr.mxu0 0.0
    %550 = vmatpush1.msra.mxu0 %v500
    %551 = vmatprep.subr.mxu0 0.0
    %552 = vmatpush1.msra.mxu0 %v501
    %553 = vmatprep.subr.mxu0 0.0
    %554 = vmatpush1.msra.mxu0 %v502
    %555 = vmatprep.subr.mxu0 0.0
    %556 = vmatpush1.msra.mxu0 %v503
    %557 = vmatprep.subr.mxu0 0.0
    %558 = vmatpush1.msra.mxu0 %v504
    %559 = vmatprep.subr.mxu0 0.0
    %560 = vmatpush1.msra.mxu0 %v505
    %561 = vmatprep.subr.mxu0 0.0
    %562 = vmatpush1.msra.mxu0 %v506
    %563 = vmatprep.subr.mxu0 0.0
    %564 = vmatpush1.msra.mxu0 %v507
    %565 = vmatprep.subr.mxu0 0.0
    %566 = vmatpush1.msra.mxu0 %v508
    %567 = vmatprep.subr.mxu0 0.0
    %568 = vmatpush1.msra.mxu0 %v509
    %569 = vmatprep.subr.mxu0 0.0
    %570 = vmatpush1.msra.mxu0 %v510
    %571 = vmatprep.subr.mxu0 0.0
    %572 = vmatpush1.msra.mxu0 %v511
    %573 = vmatprep.subr.mxu0 0.0
    %574 = vmatpush1.msra.mxu0 %v512
    %575 = vmatprep.subr.mxu0 0.0
    %576 = vmatpush1.msra.mxu0 %v513
    %577 = vmatprep.subr.mxu0 0.0
    %578 = vmatpush1.msra.mxu0 %v514
    %579 = vmatprep.mubr.f32.mxu0 %v480
    %580 = vmatmul.mubr.f32.gmra.mrb[0].mxu0 %v479
    %v581 = vpop.f32.mrb[0].mxu0
    %v582 = vadd.f32 0.0, %v581
    %v583 = vpop.f32.mrb[0].mxu0
    %584 = vmatprep.mubr.f32.mxu0 %v482
    %585 = vmatmul.mubr.f32.gmra.mrb[0].mxu0 %v481
    %v586 = vpop.f32.mrb[0].mxu0
    %v587 = vadd.f32 0.0, %v586
    %v588 = vpop.f32.mrb[0].mxu0
    %589 = vdwg.mxu0
    %590 = vst [vmem:[#allocation10] sm:$0xff] %v582
    %591 = vst [vmem:[#allocation10 + $0x8] sm:$0xff] %v587
    // Predicated region
    $region34: #{tpu_custom_call.1} parent=1 // pred_check
      _
    $region35: #{tpu_custom_call.1} parent=1 // pred_check_branch
      %593 = sbr.rel (0) target = $region37
    $region36: #{tpu_custom_call.1} parent=1 // pred_region
      %s595 = ssub.s32 256, 256
      %596 = vsyncadd [#allocation4], %s595
      %s597 = sshll.u32 [#allocation10], 4
      %s598 = int_to_ptr.vmem [resolvable:$true] %s597
      %603 = dma.vmem_to_hbm [thread:$0]  %s598, 256, %s4, [#allocation4], 128, 128, 8
    $region37: #{tpu_custom_call.1} parent=1 // pred_fallthru
      _
    // Predicated region
    $region38: #{tpu_custom_call.1} parent=1 // pred_check
      _
    $region39: #{tpu_custom_call.1} parent=1 // pred_check_branch
      %605 = sbr.rel (0) target = $region41
    $region40: #{tpu_custom_call.1} parent=1 // pred_region
      %606 = dma.done [#allocation4], 256
    $region41: #{tpu_custom_call.1} parent=1 // pred_fallthru
      _
    %607 = vsyncpa [#allocation3], 1
    %608 = vsyncpa [#allocation6], 1
    %609 = vsyncpa [#allocation9], 1
    %610 = vsyncpa [#allocation4], 1

</llo_original>
